<compile_context>
chip_gen: v7x
topology: tpu7x:2x2x1
jax: 0.10.0
libtpu: 0.0.40
codegen_flags: <defaults>
</compile_context>

<pallas_src>
import functools

import jax
import jax.numpy as jnp
from jax.experimental import pallas as pl
from jax.experimental.pallas import tpu as pltpu


def _bn_relu_conv_bn_relu_kernel(x_ref, w_ref, bn1_ref, bn2_ref, o_ref):
    # x_ref  : (Cin, P)    channels x pixels (free reshape of NCHW)
    # w_ref  : (Cout, Cin) 1x1 conv weight (no transpose needed)
    # bn1_ref: (Cin, 2)    [:, 0] = scale, [:, 1] = shift   (folded BN1)
    # bn2_ref: (Cout, 2)   [:, 0] = scale, [:, 1] = shift   (folded BN2)
    # o_ref  : (Cout, P)
    s1 = bn1_ref[:, 0:1]          # (Cin, 1) -> broadcast along lanes (pixels)
    b1 = bn1_ref[:, 1:2]
    s2 = bn2_ref[:, 0:1]          # (Cout, 1)
    b2 = bn2_ref[:, 1:2]

    # BN1 (folded) + ReLU
    h = jnp.maximum(x_ref[...] * s1 + b1, 0.0)
    # 1x1 conv == matmul over channels (MXU): (Cout, Cin) @ (Cin, P)
    y = jnp.dot(w_ref[...], h, preferred_element_type=jnp.float32)
    # BN2 (folded) + ReLU
    o_ref[...] = jnp.maximum(y * s2 + b2, 0.0)


@functools.partial(jax.jit, static_argnames=("eps",))
def bn_relu_conv_bn_relu(x_nchw, conv_w, g1, beta1, m1, v1, g2, beta2, m2, v2,
                         eps=1e-5):
    """Forward pass of M (inference-mode BatchNorm semantics).

    x_nchw : (N, Cin, H, W) float32
    conv_w : (Cout, Cin, 1, 1) float32
    returns (N, Cout, H, W) float32
    """
    N, Cin, H, W = x_nchw.shape
    Cout = conv_w.shape[0]
    P = H * W

    # Fold BN params: y = (x - mean)/sqrt(var+eps)*gamma + beta = x*s + b
    s1 = g1 * jax.lax.rsqrt(v1 + eps)
    b1 = beta1 - m1 * s1
    s2 = g2 * jax.lax.rsqrt(v2 + eps)
    b2 = beta2 - m2 * s2
    bn1 = jnp.stack([s1, b1], axis=-1)   # (Cin, 2)
    bn2 = jnp.stack([s2, b2], axis=-1)   # (Cout, 2)

    # Free reshapes (no data movement): NCHW -> (N, Cin, P); OIHW -> (Cout, Cin)
    x_r = x_nchw.reshape(N, Cin, P)
    w_r = conv_w.reshape(Cout, Cin)

    out = pl.pallas_call(
        _bn_relu_conv_bn_relu_kernel,
        out_shape=jax.ShapeDtypeStruct((N, Cout, P), jnp.float32),
        grid=(N,),                                    # single grid point for N=1
        in_specs=[
            pl.BlockSpec((None, Cin, P), lambda n: (n, 0, 0)),
            pl.BlockSpec((Cout, Cin), lambda n: (0, 0)),
            pl.BlockSpec((Cin, 2), lambda n: (0, 0)),
            pl.BlockSpec((Cout, 2), lambda n: (0, 0)),
        ],
        out_specs=pl.BlockSpec((None, Cout, P), lambda n: (n, 0, 0)),
        compiler_params=pltpu.CompilerParams(
            dimension_semantics=("arbitrary",)),
    )(x_r, w_r, bn1, bn2)

    # (N, Cout, P) -> NCHW, free reshape.
    return out.reshape(N, Cout, H, W)


if __name__ == "__main__":
    key = jax.random.PRNGKey(0)
    ks = jax.random.split(key, 8)

    N, Cin, H, W, Cout = 1, 704, 7, 7, 128

    x = jax.random.normal(ks[0], (N, Cin, H, W), dtype=jnp.float32)
    conv_w = jax.random.normal(ks[1], (Cout, Cin, 1, 1), dtype=jnp.float32) * 0.05

    # BN1 params (inference-mode running stats)
    g1 = jax.random.normal(ks[2], (Cin,), dtype=jnp.float32) * 0.1 + 1.0
    beta1 = jax.random.normal(ks[3], (Cin,), dtype=jnp.float32) * 0.1
    m1 = jax.random.normal(ks[4], (Cin,), dtype=jnp.float32) * 0.1
    v1 = jax.random.uniform(ks[5], (Cin,), dtype=jnp.float32,
                            minval=0.5, maxval=1.5)

    # BN2 params
    g2 = jax.random.normal(ks[6], (Cout,), dtype=jnp.float32) * 0.1 + 1.0
    beta2 = jax.random.normal(ks[7], (Cout,), dtype=jnp.float32) * 0.1
    m2 = jnp.zeros((Cout,), dtype=jnp.float32)
    v2 = jnp.ones((Cout,), dtype=jnp.float32)

    out = bn_relu_conv_bn_relu(x, conv_w, g1, beta1, m1, v1, g2, beta2, m2, v2)
    out = jax.block_until_ready(out)

    # Reference check in plain JAX (same inference-mode BN semantics).
    def ref(x):
        h = (x - m1[None, :, None, None]) * jax.lax.rsqrt(
            v1[None, :, None, None] + 1e-5) * g1[None, :, None, None] \
            + beta1[None, :, None, None]
        h = jnp.maximum(h, 0.0)
        y = jax.lax.conv_general_dilated(
            h, conv_w, window_strides=(1, 1), padding="VALID",
            dimension_numbers=("NCHW", "OIHW", "NCHW"))
        y = (y - m2[None, :, None, None]) * jax.lax.rsqrt(
            v2[None, :, None, None] + 1e-5) * g2[None, :, None, None] \
            + beta2[None, :, None, None]
        return jnp.maximum(y, 0.0)

    expected = ref(x)
    assert out.shape == (N, Cout, H, W)
    assert jnp.allclose(out, expected, atol=1e-3, rtol=1e-3)

    print("KERNEL_OK")
</pallas_src>

<mosaic_0001>
module attributes {stable_mosaic.version = 11 : i64} {
  func.func @_bn_relu_conv_bn_relu_kernel(%arg0: i32, %arg1: memref<1x704x49xf32, #tpu.memory_space<vmem>>, %arg2: memref<128x704xf32, #tpu.memory_space<vmem>>, %arg3: memref<704x2xf32, #tpu.memory_space<vmem>>, %arg4: memref<128x2xf32, #tpu.memory_space<vmem>>, %arg5: memref<1x128x49xf32, #tpu.memory_space<vmem>>) attributes {dimension_semantics = [#tpu.dimension_semantics<arbitrary>], iteration_bounds = array<i64: 1>, scalar_prefetch = 0 : i64, scratch_operands = 0 : i64, tpu.core_type = #tpu.core_type<tc>, window_params = [{transform_indices = @transform_0, window_bounds = array<i64: 1, 704, 49>}, {pipeline_mode = #tpu.pipeline_mode<synchronous>, transform_indices = @transform_1, window_bounds = array<i64: 128, 704>}, {pipeline_mode = #tpu.pipeline_mode<synchronous>, transform_indices = @transform_2, window_bounds = array<i64: 704, 2>}, {pipeline_mode = #tpu.pipeline_mode<synchronous>, transform_indices = @transform_3, window_bounds = array<i64: 128, 2>}, {transform_indices = @transform_4, window_bounds = array<i64: 1, 128, 49>}]} {
    %c0 = arith.constant 0 : index
    %c0_0 = arith.constant 0 : index
    %0 = vector.load %arg3[%c0, %c0_0] : memref<704x2xf32, #tpu.memory_space<vmem>>, vector<704x1xf32>
    %c0_1 = arith.constant 0 : index
    %c1 = arith.constant 1 : index
    %1 = vector.load %arg3[%c0_1, %c1] : memref<704x2xf32, #tpu.memory_space<vmem>>, vector<704x1xf32>
    %c0_2 = arith.constant 0 : index
    %c0_3 = arith.constant 0 : index
    %2 = vector.load %arg4[%c0_2, %c0_3] : memref<128x2xf32, #tpu.memory_space<vmem>>, vector<128x1xf32>
    %c0_4 = arith.constant 0 : index
    %c1_5 = arith.constant 1 : index
    %3 = vector.load %arg4[%c0_4, %c1_5] : memref<128x2xf32, #tpu.memory_space<vmem>>, vector<128x1xf32>
    %c0_6 = arith.constant 0 : index
    %c0_7 = arith.constant 0 : index
    %c0_8 = arith.constant 0 : index
    %4 = vector.load %arg1[%c0_6, %c0_7, %c0_8] : memref<1x704x49xf32, #tpu.memory_space<vmem>>, vector<1x704x49xf32>
    %5 = vector.shape_cast %4 : vector<1x704x49xf32> to vector<704x49xf32>
    %6 = vector.broadcast %0 : vector<704x1xf32> to vector<704x49xf32>
    %7 = arith.mulf %5, %6 : vector<704x49xf32>
    %8 = vector.broadcast %1 : vector<704x1xf32> to vector<704x49xf32>
    %9 = arith.addf %7, %8 : vector<704x49xf32>
    %cst = arith.constant 0.000000e+00 : f32
    %10 = vector.broadcast %cst : f32 to vector<704x49xf32>
    %11 = arith.maximumf %9, %10 : vector<704x49xf32>
    %c0_9 = arith.constant 0 : index
    %c0_10 = arith.constant 0 : index
    %12 = vector.load %arg2[%c0_9, %c0_10] : memref<128x704xf32, #tpu.memory_space<vmem>>, vector<128x704xf32>
    %cst_11 = arith.constant dense<0.000000e+00> : vector<128x49xf32>
    %13 = tpu.matmul %12, %11, %cst_11 {dimension_numbers = #tpu.dot_dimension_numbers<[1], [0], [0], [1], [0, 0, 1, 1], [], []>} : vector<128x704xf32>, vector<704x49xf32>, vector<128x49xf32> -> vector<128x49xf32>
    %14 = vector.broadcast %2 : vector<128x1xf32> to vector<128x49xf32>
    %15 = arith.mulf %13, %14 : vector<128x49xf32>
    %16 = vector.broadcast %3 : vector<128x1xf32> to vector<128x49xf32>
    %17 = arith.addf %15, %16 : vector<128x49xf32>
    %cst_12 = arith.constant 0.000000e+00 : f32
    %18 = vector.broadcast %cst_12 : f32 to vector<128x49xf32>
    %19 = arith.maximumf %17, %18 : vector<128x49xf32>
    %c0_13 = arith.constant 0 : index
    %c0_14 = arith.constant 0 : index
    %c0_15 = arith.constant 0 : index
    %20 = vector.load %arg5[%c0_13, %c0_14, %c0_15] : memref<1x128x49xf32, #tpu.memory_space<vmem>>, vector<1x128x49xf32>
    %21 = vector.shape_cast %20 : vector<1x128x49xf32> to vector<128x49xf32>
    %22 = vector.shape_cast %19 : vector<128x49xf32> to vector<1x128x49xf32>
    tpu.vector_store %arg5[%c0_13, %c0_14, %c0_15], %22 {strides = array<i32>} : memref<1x128x49xf32, #tpu.memory_space<vmem>>, vector<1x128x49xf32>,
    return
  }
  func.func @transform_0(%arg0: i32) -> (i32, i32, i32) {
    %c0_i32 = arith.constant 0 : i32
    %c0_i32_0 = arith.constant 0 : i32
    %c0_i32_1 = arith.constant 0 : i32
    return %arg0, %c0_i32, %c0_i32_0 : i32, i32, i32
  }
  func.func @transform_1(%arg0: i32) -> (i32, i32) {
    %c0_i32 = arith.constant 0 : i32
    %c0_i32_0 = arith.constant 0 : i32
    %c0_i32_1 = arith.constant 0 : i32
    return %c0_i32, %c0_i32_0 : i32, i32
  }
  func.func @transform_2(%arg0: i32) -> (i32, i32) {
    %c0_i32 = arith.constant 0 : i32
    %c0_i32_0 = arith.constant 0 : i32
    %c0_i32_1 = arith.constant 0 : i32
    return %c0_i32, %c0_i32_0 : i32, i32
  }
  func.func @transform_3(%arg0: i32) -> (i32, i32) {
    %c0_i32 = arith.constant 0 : i32
    %c0_i32_0 = arith.constant 0 : i32
    %c0_i32_1 = arith.constant 0 : i32
    return %c0_i32, %c0_i32_0 : i32, i32
  }
  func.func @transform_4(%arg0: i32) -> (i32, i32, i32) {
    %c0_i32 = arith.constant 0 : i32
    %c0_i32_0 = arith.constant 0 : i32
    %c0_i32_1 = arith.constant 0 : i32
    return %arg0, %c0_i32, %c0_i32_0 : i32, i32, i32
  }
}

</mosaic_0001>

<llo_original>
// kernel: bn_relu_conv_bn_relu.1
$region0: #{bn_relu_conv_bn_relu.1}
  #allocation0 [shape = 'u32[]', space=smem, size = 0x4, offset = 0x4, fixed_abs, tag = 'smem constant byte address 0x4 - core index']
  #allocation1 [shape = 'u32[144,128]{1,0:T(1,128)}', space=vmem, size = 0x12000, scoped, tag = 'internal scratch']
  %s0 = inlined_call_operand.vmem [shape: f32[1,704,49], index: 0, kind: input, shape index: {}]
  %s1 = inlined_call_operand.vmem [shape: f32[128,704], index: 1, kind: input, shape index: {}]
  %s2 = inlined_call_operand.vmem [shape: f32[704,2], index: 2, kind: input, shape index: {}]
  %s3 = inlined_call_operand.vmem [shape: f32[128,2], index: 3, kind: input, shape index: {}]
  %s4 = inlined_call_operand.vmem [shape: f32[1,128,49], index: 4, kind: output, shape index: {}]
  %s5 = sld [smem:[#allocation0]]
  $region26: #{bn_relu_conv_bn_relu.1} parent=0
    _
  %s7 = ssub.s32 1, %s5
  %s8 = scalar_select 0, %s7, %s5
  // Predicated region
  $region2: #{bn_relu_conv_bn_relu.1} parent=0 // pred_check
    _
  $region3: #{bn_relu_conv_bn_relu.1} parent=0 // pred_check_branch
    %10 = sbr.rel (0) target = $region5
  $region4: #{bn_relu_conv_bn_relu.1} parent=0 // pred_region
    _
  $region5: #{bn_relu_conv_bn_relu.1} parent=0 // pred_fallthru
    _
  // Predicated region
  $region6: #{bn_relu_conv_bn_relu.1} parent=0 // pred_check
    _
  $region7: #{bn_relu_conv_bn_relu.1} parent=0 // pred_check_branch
    %12 = sbr.rel (0) target = $region9
  $region8: #{bn_relu_conv_bn_relu.1} parent=0 // pred_region
    _
  $region9: #{bn_relu_conv_bn_relu.1} parent=0 // pred_fallthru
    _
  // Predicated region
  $region10: #{bn_relu_conv_bn_relu.1} parent=0 // pred_check
    _
  $region11: #{bn_relu_conv_bn_relu.1} parent=0 // pred_check_branch
    %14 = sbr.rel (0) target = $region13
  $region12: #{bn_relu_conv_bn_relu.1} parent=0 // pred_region
    _
  $region13: #{bn_relu_conv_bn_relu.1} parent=0 // pred_fallthru
    _
  // Predicated region
  $region14: #{bn_relu_conv_bn_relu.1} parent=0 // pred_check
    _
  $region15: #{bn_relu_conv_bn_relu.1} parent=0 // pred_check_branch
    %16 = sbr.rel (0) target = $region17
  $region16: #{bn_relu_conv_bn_relu.1} parent=0 // pred_region
    _
  $region17: #{bn_relu_conv_bn_relu.1} parent=0 // pred_fallthru
    _
  %v17 = vld [vmem:[%s2] sm:$0xff]
  %v18 = vld [vmem:[%s2 + $0x8] sm:$0xff]
  %v19 = vld [vmem:[%s2 + $0x10] sm:$0xff]
  %v20 = vld [vmem:[%s2 + $0x18] sm:$0xff]
  %v21 = vld [vmem:[%s2 + $0x20] sm:$0xff]
  %v22 = vld [vmem:[%s2 + $0x28] sm:$0xff]
  %v23 = vld [vmem:[%s2 + $0x30] sm:$0xff]
  %v24 = vld [vmem:[%s2 + $0x38] sm:$0xff]
  %v25 = vld [vmem:[%s2 + $0x40] sm:$0xff]
  %v26 = vld [vmem:[%s2 + $0x48] sm:$0xff]
  %v27 = vld [vmem:[%s2 + $0x50] sm:$0xff]
  %v28 = vld [vmem:[%s2 + $0x58] sm:$0xff]
  %v29 = vld [vmem:[%s2 + $0x60] sm:$0xff]
  %v30 = vld [vmem:[%s2 + $0x68] sm:$0xff]
  %v31 = vld [vmem:[%s2 + $0x70] sm:$0xff]
  %v32 = vld [vmem:[%s2 + $0x78] sm:$0xff]
  %v33 = vld [vmem:[%s2 + $0x80] sm:$0xff]
  %v34 = vld [vmem:[%s2 + $0x88] sm:$0xff]
  %v35 = vld [vmem:[%s2 + $0x90] sm:$0xff]
  %v36 = vld [vmem:[%s2 + $0x98] sm:$0xff]
  %v37 = vld [vmem:[%s2 + $0xa0] sm:$0xff]
  %v38 = vld [vmem:[%s2 + $0xa8] sm:$0xff]
  %v39 = vld [vmem:[%s2 + $0xb0] sm:$0xff]
  %v40 = vld [vmem:[%s2 + $0xb8] sm:$0xff]
  %v41 = vld [vmem:[%s2 + $0xc0] sm:$0xff]
  %v42 = vld [vmem:[%s2 + $0xc8] sm:$0xff]
  %v43 = vld [vmem:[%s2 + $0xd0] sm:$0xff]
  %v44 = vld [vmem:[%s2 + $0xd8] sm:$0xff]
  %v45 = vld [vmem:[%s2 + $0xe0] sm:$0xff]
  %v46 = vld [vmem:[%s2 + $0xe8] sm:$0xff]
  %v47 = vld [vmem:[%s2 + $0xf0] sm:$0xff]
  %v48 = vld [vmem:[%s2 + $0xf8] sm:$0xff]
  %v49 = vld [vmem:[%s2 + $0x100] sm:$0xff]
  %v50 = vld [vmem:[%s2 + $0x108] sm:$0xff]
  %v51 = vld [vmem:[%s2 + $0x110] sm:$0xff]
  %v52 = vld [vmem:[%s2 + $0x118] sm:$0xff]
  %v53 = vld [vmem:[%s2 + $0x120] sm:$0xff]
  %v54 = vld [vmem:[%s2 + $0x128] sm:$0xff]
  %v55 = vld [vmem:[%s2 + $0x130] sm:$0xff]
  %v56 = vld [vmem:[%s2 + $0x138] sm:$0xff]
  %v57 = vld [vmem:[%s2 + $0x140] sm:$0xff]
  %v58 = vld [vmem:[%s2 + $0x148] sm:$0xff]
  %v59 = vld [vmem:[%s2 + $0x150] sm:$0xff]
  %v60 = vld [vmem:[%s2 + $0x158] sm:$0xff]
  %v61 = vld [vmem:[%s2 + $0x160] sm:$0xff]
  %v62 = vld [vmem:[%s2 + $0x168] sm:$0xff]
  %v63 = vld [vmem:[%s2 + $0x170] sm:$0xff]
  %v64 = vld [vmem:[%s2 + $0x178] sm:$0xff]
  %v65 = vld [vmem:[%s2 + $0x180] sm:$0xff]
  %v66 = vld [vmem:[%s2 + $0x188] sm:$0xff]
  %v67 = vld [vmem:[%s2 + $0x190] sm:$0xff]
  %v68 = vld [vmem:[%s2 + $0x198] sm:$0xff]
  %v69 = vld [vmem:[%s2 + $0x1a0] sm:$0xff]
  %v70 = vld [vmem:[%s2 + $0x1a8] sm:$0xff]
  %v71 = vld [vmem:[%s2 + $0x1b0] sm:$0xff]
  %v72 = vld [vmem:[%s2 + $0x1b8] sm:$0xff]
  %v73 = vld [vmem:[%s2 + $0x1c0] sm:$0xff]
  %v74 = vld [vmem:[%s2 + $0x1c8] sm:$0xff]
  %v75 = vld [vmem:[%s2 + $0x1d0] sm:$0xff]
  %v76 = vld [vmem:[%s2 + $0x1d8] sm:$0xff]
  %v77 = vld [vmem:[%s2 + $0x1e0] sm:$0xff]
  %v78 = vld [vmem:[%s2 + $0x1e8] sm:$0xff]
  %v79 = vld [vmem:[%s2 + $0x1f0] sm:$0xff]
  %v80 = vld [vmem:[%s2 + $0x1f8] sm:$0xff]
  %v81 = vld [vmem:[%s2 + $0x200] sm:$0xff]
  %v82 = vld [vmem:[%s2 + $0x208] sm:$0xff]
  %v83 = vld [vmem:[%s2 + $0x210] sm:$0xff]
  %v84 = vld [vmem:[%s2 + $0x218] sm:$0xff]
  %v85 = vld [vmem:[%s2 + $0x220] sm:$0xff]
  %v86 = vld [vmem:[%s2 + $0x228] sm:$0xff]
  %v87 = vld [vmem:[%s2 + $0x230] sm:$0xff]
  %v88 = vld [vmem:[%s2 + $0x238] sm:$0xff]
  %v89 = vld [vmem:[%s2 + $0x240] sm:$0xff]
  %v90 = vld [vmem:[%s2 + $0x248] sm:$0xff]
  %v91 = vld [vmem:[%s2 + $0x250] sm:$0xff]
  %v92 = vld [vmem:[%s2 + $0x258] sm:$0xff]
  %v93 = vld [vmem:[%s2 + $0x260] sm:$0xff]
  %v94 = vld [vmem:[%s2 + $0x268] sm:$0xff]
  %v95 = vld [vmem:[%s2 + $0x270] sm:$0xff]
  %v96 = vld [vmem:[%s2 + $0x278] sm:$0xff]
  %v97 = vld [vmem:[%s2 + $0x280] sm:$0xff]
  %v98 = vld [vmem:[%s2 + $0x288] sm:$0xff]
  %v99 = vld [vmem:[%s2 + $0x290] sm:$0xff]
  %v100 = vld [vmem:[%s2 + $0x298] sm:$0xff]
  %v101 = vld [vmem:[%s2 + $0x2a0] sm:$0xff]
  %v102 = vld [vmem:[%s2 + $0x2a8] sm:$0xff]
  %v103 = vld [vmem:[%s2 + $0x2b0] sm:$0xff]
  %v104 = vld [vmem:[%s2 + $0x2b8] sm:$0xff]
  %v105 = vld [vmem:[%s3] sm:$0xff]
  %v106 = vld [vmem:[%s3 + $0x8] sm:$0xff]
  %v107 = vld [vmem:[%s3 + $0x10] sm:$0xff]
  %v108 = vld [vmem:[%s3 + $0x18] sm:$0xff]
  %v109 = vld [vmem:[%s3 + $0x20] sm:$0xff]
  %v110 = vld [vmem:[%s3 + $0x28] sm:$0xff]
  %v111 = vld [vmem:[%s3 + $0x30] sm:$0xff]
  %v112 = vld [vmem:[%s3 + $0x38] sm:$0xff]
  %v113 = vld [vmem:[%s3 + $0x40] sm:$0xff]
  %v114 = vld [vmem:[%s3 + $0x48] sm:$0xff]
  %v115 = vld [vmem:[%s3 + $0x50] sm:$0xff]
  %v116 = vld [vmem:[%s3 + $0x58] sm:$0xff]
  %v117 = vld [vmem:[%s3 + $0x60] sm:$0xff]
  %v118 = vld [vmem:[%s3 + $0x68] sm:$0xff]
  %v119 = vld [vmem:[%s3 + $0x70] sm:$0xff]
  %v120 = vld [vmem:[%s3 + $0x78] sm:$0xff]
  %v121 = vld [vmem:[%s0] sm:$0xff]
  %v122 = vld [vmem:[%s0 + $0x8] sm:$0xff]
  %v123 = vld [vmem:[%s0 + $0x10] sm:$0xff]
  %v124 = vld [vmem:[%s0 + $0x18] sm:$0xff]
  %v125 = vld [vmem:[%s0 + $0x20] sm:$0xff]
  %v126 = vld [vmem:[%s0 + $0x28] sm:$0xff]
  %v127 = vld [vmem:[%s0 + $0x30] sm:$0xff]
  %v128 = vld [vmem:[%s0 + $0x38] sm:$0xff]
  %v129 = vld [vmem:[%s0 + $0x40] sm:$0xff]
  %v130 = vld [vmem:[%s0 + $0x48] sm:$0xff]
  %v131 = vld [vmem:[%s0 + $0x50] sm:$0xff]
  %v132 = vld [vmem:[%s0 + $0x58] sm:$0xff]
  %v133 = vld [vmem:[%s0 + $0x60] sm:$0xff]
  %v134 = vld [vmem:[%s0 + $0x68] sm:$0xff]
  %v135 = vld [vmem:[%s0 + $0x70] sm:$0xff]
  %v136 = vld [vmem:[%s0 + $0x78] sm:$0xff]
  %v137 = vld [vmem:[%s0 + $0x80] sm:$0xff]
  %v138 = vld [vmem:[%s0 + $0x88] sm:$0xff]
  %v139 = vld [vmem:[%s0 + $0x90] sm:$0xff]
  %v140 = vld [vmem:[%s0 + $0x98] sm:$0xff]
  %v141 = vld [vmem:[%s0 + $0xa0] sm:$0xff]
  %v142 = vld [vmem:[%s0 + $0xa8] sm:$0xff]
  %v143 = vld [vmem:[%s0 + $0xb0] sm:$0xff]
  %v144 = vld [vmem:[%s0 + $0xb8] sm:$0xff]
  %v145 = vld [vmem:[%s0 + $0xc0] sm:$0xff]
  %v146 = vld [vmem:[%s0 + $0xc8] sm:$0xff]
  %v147 = vld [vmem:[%s0 + $0xd0] sm:$0xff]
  %v148 = vld [vmem:[%s0 + $0xd8] sm:$0xff]
  %v149 = vld [vmem:[%s0 + $0xe0] sm:$0xff]
  %v150 = vld [vmem:[%s0 + $0xe8] sm:$0xff]
  %v151 = vld [vmem:[%s0 + $0xf0] sm:$0xff]
  %v152 = vld [vmem:[%s0 + $0xf8] sm:$0xff]
  %v153 = vld [vmem:[%s0 + $0x100] sm:$0xff]
  %v154 = vld [vmem:[%s0 + $0x108] sm:$0xff]
  %v155 = vld [vmem:[%s0 + $0x110] sm:$0xff]
  %v156 = vld [vmem:[%s0 + $0x118] sm:$0xff]
  %v157 = vld [vmem:[%s0 + $0x120] sm:$0xff]
  %v158 = vld [vmem:[%s0 + $0x128] sm:$0xff]
  %v159 = vld [vmem:[%s0 + $0x130] sm:$0xff]
  %v160 = vld [vmem:[%s0 + $0x138] sm:$0xff]
  %v161 = vld [vmem:[%s0 + $0x140] sm:$0xff]
  %v162 = vld [vmem:[%s0 + $0x148] sm:$0xff]
  %v163 = vld [vmem:[%s0 + $0x150] sm:$0xff]
  %v164 = vld [vmem:[%s0 + $0x158] sm:$0xff]
  %v165 = vld [vmem:[%s0 + $0x160] sm:$0xff]
  %v166 = vld [vmem:[%s0 + $0x168] sm:$0xff]
  %v167 = vld [vmem:[%s0 + $0x170] sm:$0xff]
  %v168 = vld [vmem:[%s0 + $0x178] sm:$0xff]
  %v169 = vld [vmem:[%s0 + $0x180] sm:$0xff]
  %v170 = vld [vmem:[%s0 + $0x188] sm:$0xff]
  %v171 = vld [vmem:[%s0 + $0x190] sm:$0xff]
  %v172 = vld [vmem:[%s0 + $0x198] sm:$0xff]
  %v173 = vld [vmem:[%s0 + $0x1a0] sm:$0xff]
  %v174 = vld [vmem:[%s0 + $0x1a8] sm:$0xff]
  %v175 = vld [vmem:[%s0 + $0x1b0] sm:$0xff]
  %v176 = vld [vmem:[%s0 + $0x1b8] sm:$0xff]
  %v177 = vld [vmem:[%s0 + $0x1c0] sm:$0xff]
  %v178 = vld [vmem:[%s0 + $0x1c8] sm:$0xff]
  %v179 = vld [vmem:[%s0 + $0x1d0] sm:$0xff]
  %v180 = vld [vmem:[%s0 + $0x1d8] sm:$0xff]
  %v181 = vld [vmem:[%s0 + $0x1e0] sm:$0xff]
  %v182 = vld [vmem:[%s0 + $0x1e8] sm:$0xff]
  %v183 = vld [vmem:[%s0 + $0x1f0] sm:$0xff]
  %v184 = vld [vmem:[%s0 + $0x1f8] sm:$0xff]
  %v185 = vld [vmem:[%s0 + $0x200] sm:$0xff]
  %v186 = vld [vmem:[%s0 + $0x208] sm:$0xff]
  %v187 = vld [vmem:[%s0 + $0x210] sm:$0xff]
  %v188 = vld [vmem:[%s0 + $0x218] sm:$0xff]
  %v189 = vld [vmem:[%s0 + $0x220] sm:$0xff]
  %v190 = vld [vmem:[%s0 + $0x228] sm:$0xff]
  %v191 = vld [vmem:[%s0 + $0x230] sm:$0xff]
  %v192 = vld [vmem:[%s0 + $0x238] sm:$0xff]
  %v193 = vld [vmem:[%s0 + $0x240] sm:$0xff]
  %v194 = vld [vmem:[%s0 + $0x248] sm:$0xff]
  %v195 = vld [vmem:[%s0 + $0x250] sm:$0xff]
  %v196 = vld [vmem:[%s0 + $0x258] sm:$0xff]
  %v197 = vld [vmem:[%s0 + $0x260] sm:$0xff]
  %v198 = vld [vmem:[%s0 + $0x268] sm:$0xff]
  %v199 = vld [vmem:[%s0 + $0x270] sm:$0xff]
  %v200 = vld [vmem:[%s0 + $0x278] sm:$0xff]
  %v201 = vld [vmem:[%s0 + $0x280] sm:$0xff]
  %v202 = vld [vmem:[%s0 + $0x288] sm:$0xff]
  %v203 = vld [vmem:[%s0 + $0x290] sm:$0xff]
  %v204 = vld [vmem:[%s0 + $0x298] sm:$0xff]
  %v205 = vld [vmem:[%s0 + $0x2a0] sm:$0xff]
  %v206 = vld [vmem:[%s0 + $0x2a8] sm:$0xff]
  %v207 = vld [vmem:[%s0 + $0x2b0] sm:$0xff]
  %v208 = vld [vmem:[%s0 + $0x2b8] sm:$0xff]
  %210 = vset.pattern.permute.xlu0 0
  %211 = vperm.xlu0 %210, %v17
  %v212 = vpop.permute.xlu0 %211
  %215 = vset.pattern.permute.xlu0 0
  %216 = vperm.xlu0 %215, %v18
  %v217 = vpop.permute.xlu0 %216
  %220 = vset.pattern.permute.xlu0 0
  %221 = vperm.xlu0 %220, %v19
  %v222 = vpop.permute.xlu0 %221
  %225 = vset.pattern.permute.xlu0 0
  %226 = vperm.xlu0 %225, %v20
  %v227 = vpop.permute.xlu0 %226
  %230 = vset.pattern.permute.xlu0 0
  %231 = vperm.xlu0 %230, %v21
  %v232 = vpop.permute.xlu0 %231
  %235 = vset.pattern.permute.xlu0 0
  %236 = vperm.xlu0 %235, %v22
  %v237 = vpop.permute.xlu0 %236
  %240 = vset.pattern.permute.xlu0 0
  %241 = vperm.xlu0 %240, %v23
  %v242 = vpop.permute.xlu0 %241
  %245 = vset.pattern.permute.xlu0 0
  %246 = vperm.xlu0 %245, %v24
  %v247 = vpop.permute.xlu0 %246
  %250 = vset.pattern.permute.xlu0 0
  %251 = vperm.xlu0 %250, %v25
  %v252 = vpop.permute.xlu0 %251
  %255 = vset.pattern.permute.xlu0 0
  %256 = vperm.xlu0 %255, %v26
  %v257 = vpop.permute.xlu0 %256
  %260 = vset.pattern.permute.xlu0 0
  %261 = vperm.xlu0 %260, %v27
  %v262 = vpop.permute.xlu0 %261
  %265 = vset.pattern.permute.xlu0 0
  %266 = vperm.xlu0 %265, %v28
  %v267 = vpop.permute.xlu0 %266
  %270 = vset.pattern.permute.xlu0 0
  %271 = vperm.xlu0 %270, %v29
  %v272 = vpop.permute.xlu0 %271
  %275 = vset.pattern.permute.xlu0 0
  %276 = vperm.xlu0 %275, %v30
  %v277 = vpop.permute.xlu0 %276
  %280 = vset.pattern.permute.xlu0 0
  %281 = vperm.xlu0 %280, %v31
  %v282 = vpop.permute.xlu0 %281
  %285 = vset.pattern.permute.xlu0 0
  %286 = vperm.xlu0 %285, %v32
  %v287 = vpop.permute.xlu0 %286
  %290 = vset.pattern.permute.xlu0 0
  %291 = vperm.xlu0 %290, %v33
  %v292 = vpop.permute.xlu0 %291
  %295 = vset.pattern.permute.xlu0 0
  %296 = vperm.xlu0 %295, %v34
  %v297 = vpop.permute.xlu0 %296
  %300 = vset.pattern.permute.xlu0 0
  %301 = vperm.xlu0 %300, %v35
  %v302 = vpop.permute.xlu0 %301
  %305 = vset.pattern.permute.xlu0 0
  %306 = vperm.xlu0 %305, %v36
  %v307 = vpop.permute.xlu0 %306
  %310 = vset.pattern.permute.xlu0 0
  %311 = vperm.xlu0 %310, %v37
  %v312 = vpop.permute.xlu0 %311
  %315 = vset.pattern.permute.xlu0 0
  %316 = vperm.xlu0 %315, %v38
  %v317 = vpop.permute.xlu0 %316
  %320 = vset.pattern.permute.xlu0 0
  %321 = vperm.xlu0 %320, %v39
  %v322 = vpop.permute.xlu0 %321
  %325 = vset.pattern.permute.xlu0 0
  %326 = vperm.xlu0 %325, %v40
  %v327 = vpop.permute.xlu0 %326
  %330 = vset.pattern.permute.xlu0 0
  %331 = vperm.xlu0 %330, %v41
  %v332 = vpop.permute.xlu0 %331
  %335 = vset.pattern.permute.xlu0 0
  %336 = vperm.xlu0 %335, %v42
  %v337 = vpop.permute.xlu0 %336
  %340 = vset.pattern.permute.xlu0 0
  %341 = vperm.xlu0 %340, %v43
  %v342 = vpop.permute.xlu0 %341
  %345 = vset.pattern.permute.xlu0 0
  %346 = vperm.xlu0 %345, %v44
  %v347 = vpop.permute.xlu0 %346
  %350 = vset.pattern.permute.xlu0 0
  %351 = vperm.xlu0 %350, %v45
  %v352 = vpop.permute.xlu0 %351
  %355 = vset.pattern.permute.xlu0 0
  %356 = vperm.xlu0 %355, %v46
  %v357 = vpop.permute.xlu0 %356
  %360 = vset.pattern.permute.xlu0 0
  %361 = vperm.xlu0 %360, %v47
  %v362 = vpop.permute.xlu0 %361
  %365 = vset.pattern.permute.xlu0 0
  %366 = vperm.xlu0 %365, %v48
  %v367 = vpop.permute.xlu0 %366
  %370 = vset.pattern.permute.xlu0 0
  %371 = vperm.xlu0 %370, %v49
  %v372 = vpop.permute.xlu0 %371
  %375 = vset.pattern.permute.xlu0 0
  %376 = vperm.xlu0 %375, %v50
  %v377 = vpop.permute.xlu0 %376
  %380 = vset.pattern.permute.xlu0 0
  %381 = vperm.xlu0 %380, %v51
  %v382 = vpop.permute.xlu0 %381
  %385 = vset.pattern.permute.xlu0 0
  %386 = vperm.xlu0 %385, %v52
  %v387 = vpop.permute.xlu0 %386
  %390 = vset.pattern.permute.xlu0 0
  %391 = vperm.xlu0 %390, %v53
  %v392 = vpop.permute.xlu0 %391
  %395 = vset.pattern.permute.xlu0 0
  %396 = vperm.xlu0 %395, %v54
  %v397 = vpop.permute.xlu0 %396
  %400 = vset.pattern.permute.xlu0 0
  %401 = vperm.xlu0 %400, %v55
  %v402 = vpop.permute.xlu0 %401
  %405 = vset.pattern.permute.xlu0 0
  %406 = vperm.xlu0 %405, %v56
  %v407 = vpop.permute.xlu0 %406
  %410 = vset.pattern.permute.xlu0 0
  %411 = vperm.xlu0 %410, %v57
  %v412 = vpop.permute.xlu0 %411
  %415 = vset.pattern.permute.xlu0 0
  %416 = vperm.xlu0 %415, %v58
  %v417 = vpop.permute.xlu0 %416
  %420 = vset.pattern.permute.xlu0 0
  %421 = vperm.xlu0 %420, %v59
  %v422 = vpop.permute.xlu0 %421
  %425 = vset.pattern.permute.xlu0 0
  %426 = vperm.xlu0 %425, %v60
  %v427 = vpop.permute.xlu0 %426
  %430 = vset.pattern.permute.xlu0 0
  %431 = vperm.xlu0 %430, %v61
  %v432 = vpop.permute.xlu0 %431
  %435 = vset.pattern.permute.xlu0 0
  %436 = vperm.xlu0 %435, %v62
  %v437 = vpop.permute.xlu0 %436
  %440 = vset.pattern.permute.xlu0 0
  %441 = vperm.xlu0 %440, %v63
  %v442 = vpop.permute.xlu0 %441
  %445 = vset.pattern.permute.xlu0 0
  %446 = vperm.xlu0 %445, %v64
  %v447 = vpop.permute.xlu0 %446
  %450 = vset.pattern.permute.xlu0 0
  %451 = vperm.xlu0 %450, %v65
  %v452 = vpop.permute.xlu0 %451
  %455 = vset.pattern.permute.xlu0 0
  %456 = vperm.xlu0 %455, %v66
  %v457 = vpop.permute.xlu0 %456
  %460 = vset.pattern.permute.xlu0 0
  %461 = vperm.xlu0 %460, %v67
  %v462 = vpop.permute.xlu0 %461
  %465 = vset.pattern.permute.xlu0 0
  %466 = vperm.xlu0 %465, %v68
  %v467 = vpop.permute.xlu0 %466
  %470 = vset.pattern.permute.xlu0 0
  %471 = vperm.xlu0 %470, %v69
  %v472 = vpop.permute.xlu0 %471
  %475 = vset.pattern.permute.xlu0 0
  %476 = vperm.xlu0 %475, %v70
  %v477 = vpop.permute.xlu0 %476
  %480 = vset.pattern.permute.xlu0 0
  %481 = vperm.xlu0 %480, %v71
  %v482 = vpop.permute.xlu0 %481
  %485 = vset.pattern.permute.xlu0 0
  %486 = vperm.xlu0 %485, %v72
  %v487 = vpop.permute.xlu0 %486
  %490 = vset.pattern.permute.xlu0 0
  %491 = vperm.xlu0 %490, %v73
  %v492 = vpop.permute.xlu0 %491
  %495 = vset.pattern.permute.xlu0 0
  %496 = vperm.xlu0 %495, %v74
  %v497 = vpop.permute.xlu0 %496
  %500 = vset.pattern.permute.xlu0 0
  %501 = vperm.xlu0 %500, %v75
  %v502 = vpop.permute.xlu0 %501
  %505 = vset.pattern.permute.xlu0 0
  %506 = vperm.xlu0 %505, %v76
  %v507 = vpop.permute.xlu0 %506
  %510 = vset.pattern.permute.xlu0 0
  %511 = vperm.xlu0 %510, %v77
  %v512 = vpop.permute.xlu0 %511
  %515 = vset.pattern.permute.xlu0 0
  %516 = vperm.xlu0 %515, %v78
  %v517 = vpop.permute.xlu0 %516
  %520 = vset.pattern.permute.xlu0 0
  %521 = vperm.xlu0 %520, %v79
  %v522 = vpop.permute.xlu0 %521
  %525 = vset.pattern.permute.xlu0 0
  %526 = vperm.xlu0 %525, %v80
  %v527 = vpop.permute.xlu0 %526
  %530 = vset.pattern.permute.xlu0 0
  %531 = vperm.xlu0 %530, %v81
  %v532 = vpop.permute.xlu0 %531
  %535 = vset.pattern.permute.xlu0 0
  %536 = vperm.xlu0 %535, %v82
  %v537 = vpop.permute.xlu0 %536
  %540 = vset.pattern.permute.xlu0 0
  %541 = vperm.xlu0 %540, %v83
  %v542 = vpop.permute.xlu0 %541
  %545 = vset.pattern.permute.xlu0 0
  %546 = vperm.xlu0 %545, %v84
  %v547 = vpop.permute.xlu0 %546
  %550 = vset.pattern.permute.xlu0 0
  %551 = vperm.xlu0 %550, %v85
  %v552 = vpop.permute.xlu0 %551
  %555 = vset.pattern.permute.xlu0 0
  %556 = vperm.xlu0 %555, %v86
  %v557 = vpop.permute.xlu0 %556
  %560 = vset.pattern.permute.xlu0 0
  %561 = vperm.xlu0 %560, %v87
  %v562 = vpop.permute.xlu0 %561
  %565 = vset.pattern.permute.xlu0 0
  %566 = vperm.xlu0 %565, %v88
  %v567 = vpop.permute.xlu0 %566
  %570 = vset.pattern.permute.xlu0 0
  %571 = vperm.xlu0 %570, %v89
  %v572 = vpop.permute.xlu0 %571
  %575 = vset.pattern.permute.xlu0 0
  %576 = vperm.xlu0 %575, %v90
  %v577 = vpop.permute.xlu0 %576
  %580 = vset.pattern.permute.xlu0 0
  %581 = vperm.xlu0 %580, %v91
  %v582 = vpop.permute.xlu0 %581
  %585 = vset.pattern.permute.xlu0 0
  %586 = vperm.xlu0 %585, %v92
  %v587 = vpop.permute.xlu0 %586
  %590 = vset.pattern.permute.xlu0 0
  %591 = vperm.xlu0 %590, %v93
  %v592 = vpop.permute.xlu0 %591
  %595 = vset.pattern.permute.xlu0 0
  %596 = vperm.xlu0 %595, %v94
  %v597 = vpop.permute.xlu0 %596
  %600 = vset.pattern.permute.xlu0 0
  %601 = vperm.xlu0 %600, %v95
  %v602 = vpop.permute.xlu0 %601
  %605 = vset.pattern.permute.xlu0 0
  %606 = vperm.xlu0 %605, %v96
  %v607 = vpop.permute.xlu0 %606
  %610 = vset.pattern.permute.xlu0 0
  %611 = vperm.xlu0 %610, %v97
  %v612 = vpop.permute.xlu0 %611
  %615 = vset.pattern.permute.xlu0 0
  %616 = vperm.xlu0 %615, %v98
  %v617 = vpop.permute.xlu0 %616
  %620 = vset.pattern.permute.xlu0 0
  %621 = vperm.xlu0 %620, %v99
  %v622 = vpop.permute.xlu0 %621
  %625 = vset.pattern.permute.xlu0 0
  %626 = vperm.xlu0 %625, %v100
  %v627 = vpop.permute.xlu0 %626
  %630 = vset.pattern.permute.xlu0 0
  %631 = vperm.xlu0 %630, %v101
  %v632 = vpop.permute.xlu0 %631
  %635 = vset.pattern.permute.xlu0 0
  %636 = vperm.xlu0 %635, %v102
  %v637 = vpop.permute.xlu0 %636
  %640 = vset.pattern.permute.xlu0 0
  %641 = vperm.xlu0 %640, %v103
  %v642 = vpop.permute.xlu0 %641
  %645 = vset.pattern.permute.xlu0 0
  %646 = vperm.xlu0 %645, %v104
  %v647 = vpop.permute.xlu0 %646
  %v649 = vmul.f32 %v121, %v212
  %v650 = vmul.f32 %v122, %v217
  %v651 = vmul.f32 %v123, %v222
  %v652 = vmul.f32 %v124, %v227
  %v653 = vmul.f32 %v125, %v232
  %v654 = vmul.f32 %v126, %v237
  %v655 = vmul.f32 %v127, %v242
  %v656 = vmul.f32 %v128, %v247
  %v657 = vmul.f32 %v129, %v252
  %v658 = vmul.f32 %v130, %v257
  %v659 = vmul.f32 %v131, %v262
  %v660 = vmul.f32 %v132, %v267
  %v661 = vmul.f32 %v133, %v272
  %v662 = vmul.f32 %v134, %v277
  %v663 = vmul.f32 %v135, %v282
  %v664 = vmul.f32 %v136, %v287
  %v665 = vmul.f32 %v137, %v292
  %v666 = vmul.f32 %v138, %v297
  %v667 = vmul.f32 %v139, %v302
  %v668 = vmul.f32 %v140, %v307
  %v669 = vmul.f32 %v141, %v312
  %v670 = vmul.f32 %v142, %v317
  %v671 = vmul.f32 %v143, %v322
  %v672 = vmul.f32 %v144, %v327
  %v673 = vmul.f32 %v145, %v332
  %v674 = vmul.f32 %v146, %v337
  %v675 = vmul.f32 %v147, %v342
  %v676 = vmul.f32 %v148, %v347
  %v677 = vmul.f32 %v149, %v352
  %v678 = vmul.f32 %v150, %v357
  %v679 = vmul.f32 %v151, %v362
  %v680 = vmul.f32 %v152, %v367
  %v681 = vmul.f32 %v153, %v372
  %v682 = vmul.f32 %v154, %v377
  %v683 = vmul.f32 %v155, %v382
  %v684 = vmul.f32 %v156, %v387
  %v685 = vmul.f32 %v157, %v392
  %v686 = vmul.f32 %v158, %v397
  %v687 = vmul.f32 %v159, %v402
  %v688 = vmul.f32 %v160, %v407
  %v689 = vmul.f32 %v161, %v412
  %v690 = vmul.f32 %v162, %v417
  %v691 = vmul.f32 %v163, %v422
  %v692 = vmul.f32 %v164, %v427
  %v693 = vmul.f32 %v165, %v432
  %v694 = vmul.f32 %v166, %v437
  %v695 = vmul.f32 %v167, %v442
  %v696 = vmul.f32 %v168, %v447
  %v697 = vmul.f32 %v169, %v452
  %v698 = vmul.f32 %v170, %v457
  %v699 = vmul.f32 %v171, %v462
  %v700 = vmul.f32 %v172, %v467
  %v701 = vmul.f32 %v173, %v472
  %v702 = vmul.f32 %v174, %v477
  %v703 = vmul.f32 %v175, %v482
  %v704 = vmul.f32 %v176, %v487
  %v705 = vmul.f32 %v177, %v492
  %v706 = vmul.f32 %v178, %v497
  %v707 = vmul.f32 %v179, %v502
  %v708 = vmul.f32 %v180, %v507
  %v709 = vmul.f32 %v181, %v512
  %v710 = vmul.f32 %v182, %v517
  %v711 = vmul.f32 %v183, %v522
  %v712 = vmul.f32 %v184, %v527
  %v713 = vmul.f32 %v185, %v532
  %v714 = vmul.f32 %v186, %v537
  %v715 = vmul.f32 %v187, %v542
  %v716 = vmul.f32 %v188, %v547
  %v717 = vmul.f32 %v189, %v552
  %v718 = vmul.f32 %v190, %v557
  %v719 = vmul.f32 %v191, %v562
  %v720 = vmul.f32 %v192, %v567
  %v721 = vmul.f32 %v193, %v572
  %v722 = vmul.f32 %v194, %v577
  %v723 = vmul.f32 %v195, %v582
  %v724 = vmul.f32 %v196, %v587
  %v725 = vmul.f32 %v197, %v592
  %v726 = vmul.f32 %v198, %v597
  %v727 = vmul.f32 %v199, %v602
  %v728 = vmul.f32 %v200, %v607
  %v729 = vmul.f32 %v201, %v612
  %v730 = vmul.f32 %v202, %v617
  %v731 = vmul.f32 %v203, %v622
  %v732 = vmul.f32 %v204, %v627
  %v733 = vmul.f32 %v205, %v632
  %v734 = vmul.f32 %v206, %v637
  %v735 = vmul.f32 %v207, %v642
  %v736 = vmul.f32 %v208, %v647
  %737 = vset.pattern.permute.xlu0 1
  %738 = vperm.xlu0 %737, %v17
  %v739 = vpop.permute.xlu0 %738
  %741 = vset.pattern.permute.xlu0 1
  %742 = vperm.xlu0 %741, %v18
  %v743 = vpop.permute.xlu0 %742
  %745 = vset.pattern.permute.xlu0 1
  %746 = vperm.xlu0 %745, %v19
  %v747 = vpop.permute.xlu0 %746
  %749 = vset.pattern.permute.xlu0 1
  %750 = vperm.xlu0 %749, %v20
  %v751 = vpop.permute.xlu0 %750
  %753 = vset.pattern.permute.xlu0 1
  %754 = vperm.xlu0 %753, %v21
  %v755 = vpop.permute.xlu0 %754
  %757 = vset.pattern.permute.xlu0 1
  %758 = vperm.xlu0 %757, %v22
  %v759 = vpop.permute.xlu0 %758
  %761 = vset.pattern.permute.xlu0 1
  %762 = vperm.xlu0 %761, %v23
  %v763 = vpop.permute.xlu0 %762
  %765 = vset.pattern.permute.xlu0 1
  %766 = vperm.xlu0 %765, %v24
  %v767 = vpop.permute.xlu0 %766
  %769 = vset.pattern.permute.xlu0 1
  %770 = vperm.xlu0 %769, %v25
  %v771 = vpop.permute.xlu0 %770
  %773 = vset.pattern.permute.xlu0 1
  %774 = vperm.xlu0 %773, %v26
  %v775 = vpop.permute.xlu0 %774
  %777 = vset.pattern.permute.xlu0 1
  %778 = vperm.xlu0 %777, %v27
  %v779 = vpop.permute.xlu0 %778
  %781 = vset.pattern.permute.xlu0 1
  %782 = vperm.xlu0 %781, %v28
  %v783 = vpop.permute.xlu0 %782
  %785 = vset.pattern.permute.xlu0 1
  %786 = vperm.xlu0 %785, %v29
  %v787 = vpop.permute.xlu0 %786
  %789 = vset.pattern.permute.xlu0 1
  %790 = vperm.xlu0 %789, %v30
  %v791 = vpop.permute.xlu0 %790
  %793 = vset.pattern.permute.xlu0 1
  %794 = vperm.xlu0 %793, %v31
  %v795 = vpop.permute.xlu0 %794
  %797 = vset.pattern.permute.xlu0 1
  %798 = vperm.xlu0 %797, %v32
  %v799 = vpop.permute.xlu0 %798
  %801 = vset.pattern.permute.xlu0 1
  %802 = vperm.xlu0 %801, %v33
  %v803 = vpop.permute.xlu0 %802
  %805 = vset.pattern.permute.xlu0 1
  %806 = vperm.xlu0 %805, %v34
  %v807 = vpop.permute.xlu0 %806
  %809 = vset.pattern.permute.xlu0 1
  %810 = vperm.xlu0 %809, %v35
  %v811 = vpop.permute.xlu0 %810
  %813 = vset.pattern.permute.xlu0 1
  %814 = vperm.xlu0 %813, %v36
  %v815 = vpop.permute.xlu0 %814
  %817 = vset.pattern.permute.xlu0 1
  %818 = vperm.xlu0 %817, %v37
  %v819 = vpop.permute.xlu0 %818
  %821 = vset.pattern.permute.xlu0 1
  %822 = vperm.xlu0 %821, %v38
  %v823 = vpop.permute.xlu0 %822
  %825 = vset.pattern.permute.xlu0 1
  %826 = vperm.xlu0 %825, %v39
  %v827 = vpop.permute.xlu0 %826
  %829 = vset.pattern.permute.xlu0 1
  %830 = vperm.xlu0 %829, %v40
  %v831 = vpop.permute.xlu0 %830
  %833 = vset.pattern.permute.xlu0 1
  %834 = vperm.xlu0 %833, %v41
  %v835 = vpop.permute.xlu0 %834
  %837 = vset.pattern.permute.xlu0 1
  %838 = vperm.xlu0 %837, %v42
  %v839 = vpop.permute.xlu0 %838
  %841 = vset.pattern.permute.xlu0 1
  %842 = vperm.xlu0 %841, %v43
  %v843 = vpop.permute.xlu0 %842
  %845 = vset.pattern.permute.xlu0 1
  %846 = vperm.xlu0 %845, %v44
  %v847 = vpop.permute.xlu0 %846
  %849 = vset.pattern.permute.xlu0 1
  %850 = vperm.xlu0 %849, %v45
  %v851 = vpop.permute.xlu0 %850
  %853 = vset.pattern.permute.xlu0 1
  %854 = vperm.xlu0 %853, %v46
  %v855 = vpop.permute.xlu0 %854
  %857 = vset.pattern.permute.xlu0 1
  %858 = vperm.xlu0 %857, %v47
  %v859 = vpop.permute.xlu0 %858
  %861 = vset.pattern.permute.xlu0 1
  %862 = vperm.xlu0 %861, %v48
  %v863 = vpop.permute.xlu0 %862
  %865 = vset.pattern.permute.xlu0 1
  %866 = vperm.xlu0 %865, %v49
  %v867 = vpop.permute.xlu0 %866
  %869 = vset.pattern.permute.xlu0 1
  %870 = vperm.xlu0 %869, %v50
  %v871 = vpop.permute.xlu0 %870
  %873 = vset.pattern.permute.xlu0 1
  %874 = vperm.xlu0 %873, %v51
  %v875 = vpop.permute.xlu0 %874
  %877 = vset.pattern.permute.xlu0 1
  %878 = vperm.xlu0 %877, %v52
  %v879 = vpop.permute.xlu0 %878
  %881 = vset.pattern.permute.xlu0 1
  %882 = vperm.xlu0 %881, %v53
  %v883 = vpop.permute.xlu0 %882
  %885 = vset.pattern.permute.xlu0 1
  %886 = vperm.xlu0 %885, %v54
  %v887 = vpop.permute.xlu0 %886
  %889 = vset.pattern.permute.xlu0 1
  %890 = vperm.xlu0 %889, %v55
  %v891 = vpop.permute.xlu0 %890
  %893 = vset.pattern.permute.xlu0 1
  %894 = vperm.xlu0 %893, %v56
  %v895 = vpop.permute.xlu0 %894
  %897 = vset.pattern.permute.xlu0 1
  %898 = vperm.xlu0 %897, %v57
  %v899 = vpop.permute.xlu0 %898
  %901 = vset.pattern.permute.xlu0 1
  %902 = vperm.xlu0 %901, %v58
  %v903 = vpop.permute.xlu0 %902
  %905 = vset.pattern.permute.xlu0 1
  %906 = vperm.xlu0 %905, %v59
  %v907 = vpop.permute.xlu0 %906
  %909 = vset.pattern.permute.xlu0 1
  %910 = vperm.xlu0 %909, %v60
  %v911 = vpop.permute.xlu0 %910
  %913 = vset.pattern.permute.xlu0 1
  %914 = vperm.xlu0 %913, %v61
  %v915 = vpop.permute.xlu0 %914
  %917 = vset.pattern.permute.xlu0 1
  %918 = vperm.xlu0 %917, %v62
  %v919 = vpop.permute.xlu0 %918
  %921 = vset.pattern.permute.xlu0 1
  %922 = vperm.xlu0 %921, %v63
  %v923 = vpop.permute.xlu0 %922
  %925 = vset.pattern.permute.xlu0 1
  %926 = vperm.xlu0 %925, %v64
  %v927 = vpop.permute.xlu0 %926
  %929 = vset.pattern.permute.xlu0 1
  %930 = vperm.xlu0 %929, %v65
  %v931 = vpop.permute.xlu0 %930
  %933 = vset.pattern.permute.xlu0 1
  %934 = vperm.xlu0 %933, %v66
  %v935 = vpop.permute.xlu0 %934
  %937 = vset.pattern.permute.xlu0 1
  %938 = vperm.xlu0 %937, %v67
  %v939 = vpop.permute.xlu0 %938
  %941 = vset.pattern.permute.xlu0 1
  %942 = vperm.xlu0 %941, %v68
  %v943 = vpop.permute.xlu0 %942
  %945 = vset.pattern.permute.xlu0 1
  %946 = vperm.xlu0 %945, %v69
  %v947 = vpop.permute.xlu0 %946
  %949 = vset.pattern.permute.xlu0 1
  %950 = vperm.xlu0 %949, %v70
  %v951 = vpop.permute.xlu0 %950
  %953 = vset.pattern.permute.xlu0 1
  %954 = vperm.xlu0 %953, %v71
  %v955 = vpop.permute.xlu0 %954
  %957 = vset.pattern.permute.xlu0 1
  %958 = vperm.xlu0 %957, %v72
  %v959 = vpop.permute.xlu0 %958
  %961 = vset.pattern.permute.xlu0 1
  %962 = vperm.xlu0 %961, %v73
  %v963 = vpop.permute.xlu0 %962
  %965 = vset.pattern.permute.xlu0 1
  %966 = vperm.xlu0 %965, %v74
  %v967 = vpop.permute.xlu0 %966
  %969 = vset.pattern.permute.xlu0 1
  %970 = vperm.xlu0 %969, %v75
  %v971 = vpop.permute.xlu0 %970
  %973 = vset.pattern.permute.xlu0 1
  %974 = vperm.xlu0 %973, %v76
  %v975 = vpop.permute.xlu0 %974
  %977 = vset.pattern.permute.xlu0 1
  %978 = vperm.xlu0 %977, %v77
  %v979 = vpop.permute.xlu0 %978
  %981 = vset.pattern.permute.xlu0 1
  %982 = vperm.xlu0 %981, %v78
  %v983 = vpop.permute.xlu0 %982
  %985 = vset.pattern.permute.xlu0 1
  %986 = vperm.xlu0 %985, %v79
  %v987 = vpop.permute.xlu0 %986
  %989 = vset.pattern.permute.xlu0 1
  %990 = vperm.xlu0 %989, %v80
  %v991 = vpop.permute.xlu0 %990
  %993 = vset.pattern.permute.xlu0 1
  %994 = vperm.xlu0 %993, %v81
  %v995 = vpop.permute.xlu0 %994
  %997 = vset.pattern.permute.xlu0 1
  %998 = vperm.xlu0 %997, %v82
  %v999 = vpop.permute.xlu0 %998
  %1001 = vset.pattern.permute.xlu0 1
  %1002 = vperm.xlu0 %1001, %v83
  %v1003 = vpop.permute.xlu0 %1002
  %1005 = vset.pattern.permute.xlu0 1
  %1006 = vperm.xlu0 %1005, %v84
  %v1007 = vpop.permute.xlu0 %1006
  %1009 = vset.pattern.permute.xlu0 1
  %1010 = vperm.xlu0 %1009, %v85
  %v1011 = vpop.permute.xlu0 %1010
  %1013 = vset.pattern.permute.xlu0 1
  %1014 = vperm.xlu0 %1013, %v86
  %v1015 = vpop.permute.xlu0 %1014
  %1017 = vset.pattern.permute.xlu0 1
  %1018 = vperm.xlu0 %1017, %v87
  %v1019 = vpop.permute.xlu0 %1018
  %1021 = vset.pattern.permute.xlu0 1
  %1022 = vperm.xlu0 %1021, %v88
  %v1023 = vpop.permute.xlu0 %1022
  %1025 = vset.pattern.permute.xlu0 1
  %1026 = vperm.xlu0 %1025, %v89
  %v1027 = vpop.permute.xlu0 %1026
  %1029 = vset.pattern.permute.xlu0 1
  %1030 = vperm.xlu0 %1029, %v90
  %v1031 = vpop.permute.xlu0 %1030
  %1033 = vset.pattern.permute.xlu0 1
  %1034 = vperm.xlu0 %1033, %v91
  %v1035 = vpop.permute.xlu0 %1034
  %1037 = vset.pattern.permute.xlu0 1
  %1038 = vperm.xlu0 %1037, %v92
  %v1039 = vpop.permute.xlu0 %1038
  %1041 = vset.pattern.permute.xlu0 1
  %1042 = vperm.xlu0 %1041, %v93
  %v1043 = vpop.permute.xlu0 %1042
  %1045 = vset.pattern.permute.xlu0 1
  %1046 = vperm.xlu0 %1045, %v94
  %v1047 = vpop.permute.xlu0 %1046
  %1049 = vset.pattern.permute.xlu0 1
  %1050 = vperm.xlu0 %1049, %v95
  %v1051 = vpop.permute.xlu0 %1050
  %1053 = vset.pattern.permute.xlu0 1
  %1054 = vperm.xlu0 %1053, %v96
  %v1055 = vpop.permute.xlu0 %1054
  %1057 = vset.pattern.permute.xlu0 1
  %1058 = vperm.xlu0 %1057, %v97
  %v1059 = vpop.permute.xlu0 %1058
  %1061 = vset.pattern.permute.xlu0 1
  %1062 = vperm.xlu0 %1061, %v98
  %v1063 = vpop.permute.xlu0 %1062
  %1065 = vset.pattern.permute.xlu0 1
  %1066 = vperm.xlu0 %1065, %v99
  %v1067 = vpop.permute.xlu0 %1066
  %1069 = vset.pattern.permute.xlu0 1
  %1070 = vperm.xlu0 %1069, %v100
  %v1071 = vpop.permute.xlu0 %1070
  %1073 = vset.pattern.permute.xlu0 1
  %1074 = vperm.xlu0 %1073, %v101
  %v1075 = vpop.permute.xlu0 %1074
  %1077 = vset.pattern.permute.xlu0 1
  %1078 = vperm.xlu0 %1077, %v102
  %v1079 = vpop.permute.xlu0 %1078
  %1081 = vset.pattern.permute.xlu0 1
  %1082 = vperm.xlu0 %1081, %v103
  %v1083 = vpop.permute.xlu0 %1082
  %1085 = vset.pattern.permute.xlu0 1
  %1086 = vperm.xlu0 %1085, %v104
  %v1087 = vpop.permute.xlu0 %1086
  %v1089 = vadd.f32 %v649, %v739
  %v1090 = vadd.f32 %v650, %v743
  %v1091 = vadd.f32 %v651, %v747
  %v1092 = vadd.f32 %v652, %v751
  %v1093 = vadd.f32 %v653, %v755
  %v1094 = vadd.f32 %v654, %v759
  %v1095 = vadd.f32 %v655, %v763
  %v1096 = vadd.f32 %v656, %v767
  %v1097 = vadd.f32 %v657, %v771
  %v1098 = vadd.f32 %v658, %v775
  %v1099 = vadd.f32 %v659, %v779
  %v1100 = vadd.f32 %v660, %v783
  %v1101 = vadd.f32 %v661, %v787
  %v1102 = vadd.f32 %v662, %v791
  %v1103 = vadd.f32 %v663, %v795
  %v1104 = vadd.f32 %v664, %v799
  %v1105 = vadd.f32 %v665, %v803
  %v1106 = vadd.f32 %v666, %v807
  %v1107 = vadd.f32 %v667, %v811
  %v1108 = vadd.f32 %v668, %v815
  %v1109 = vadd.f32 %v669, %v819
  %v1110 = vadd.f32 %v670, %v823
  %v1111 = vadd.f32 %v671, %v827
  %v1112 = vadd.f32 %v672, %v831
  %v1113 = vadd.f32 %v673, %v835
  %v1114 = vadd.f32 %v674, %v839
  %v1115 = vadd.f32 %v675, %v843
  %v1116 = vadd.f32 %v676, %v847
  %v1117 = vadd.f32 %v677, %v851
  %v1118 = vadd.f32 %v678, %v855
  %v1119 = vadd.f32 %v679, %v859
  %v1120 = vadd.f32 %v680, %v863
  %v1121 = vadd.f32 %v681, %v867
  %v1122 = vadd.f32 %v682, %v871
  %v1123 = vadd.f32 %v683, %v875
  %v1124 = vadd.f32 %v684, %v879
  %v1125 = vadd.f32 %v685, %v883
  %v1126 = vadd.f32 %v686, %v887
  %v1127 = vadd.f32 %v687, %v891
  %v1128 = vadd.f32 %v688, %v895
  %v1129 = vadd.f32 %v689, %v899
  %v1130 = vadd.f32 %v690, %v903
  %v1131 = vadd.f32 %v691, %v907
  %v1132 = vadd.f32 %v692, %v911
  %v1133 = vadd.f32 %v693, %v915
  %v1134 = vadd.f32 %v694, %v919
  %v1135 = vadd.f32 %v695, %v923
  %v1136 = vadd.f32 %v696, %v927
  %v1137 = vadd.f32 %v697, %v931
  %v1138 = vadd.f32 %v698, %v935
  %v1139 = vadd.f32 %v699, %v939
  %v1140 = vadd.f32 %v700, %v943
  %v1141 = vadd.f32 %v701, %v947
  %v1142 = vadd.f32 %v702, %v951
  %v1143 = vadd.f32 %v703, %v955
  %v1144 = vadd.f32 %v704, %v959
  %v1145 = vadd.f32 %v705, %v963
  %v1146 = vadd.f32 %v706, %v967
  %v1147 = vadd.f32 %v707, %v971
  %v1148 = vadd.f32 %v708, %v975
  %v1149 = vadd.f32 %v709, %v979
  %v1150 = vadd.f32 %v710, %v983
  %v1151 = vadd.f32 %v711, %v987
  %v1152 = vadd.f32 %v712, %v991
  %v1153 = vadd.f32 %v713, %v995
  %v1154 = vadd.f32 %v714, %v999
  %v1155 = vadd.f32 %v715, %v1003
  %v1156 = vadd.f32 %v716, %v1007
  %v1157 = vadd.f32 %v717, %v1011
  %v1158 = vadd.f32 %v718, %v1015
  %v1159 = vadd.f32 %v719, %v1019
  %v1160 = vadd.f32 %v720, %v1023
  %v1161 = vadd.f32 %v721, %v1027
  %v1162 = vadd.f32 %v722, %v1031
  %v1163 = vadd.f32 %v723, %v1035
  %v1164 = vadd.f32 %v724, %v1039
  %v1165 = vadd.f32 %v725, %v1043
  %v1166 = vadd.f32 %v726, %v1047
  %v1167 = vadd.f32 %v727, %v1051
  %v1168 = vadd.f32 %v728, %v1055
  %v1169 = vadd.f32 %v729, %v1059
  %v1170 = vadd.f32 %v730, %v1063
  %v1171 = vadd.f32 %v731, %v1067
  %v1172 = vadd.f32 %v732, %v1071
  %v1173 = vadd.f32 %v733, %v1075
  %v1174 = vadd.f32 %v734, %v1079
  %v1175 = vadd.f32 %v735, %v1083
  %v1176 = vadd.f32 %v736, %v1087
  %v1177 = vmax.f32 %v1089, 0.0
  %v1178 = vmax.f32 %v1090, 0.0
  %v1179 = vmax.f32 %v1091, 0.0
  %v1180 = vmax.f32 %v1092, 0.0
  %v1181 = vmax.f32 %v1093, 0.0
  %v1182 = vmax.f32 %v1094, 0.0
  %v1183 = vmax.f32 %v1095, 0.0
  %v1184 = vmax.f32 %v1096, 0.0
  %v1185 = vmax.f32 %v1097, 0.0
  %v1186 = vmax.f32 %v1098, 0.0
  %v1187 = vmax.f32 %v1099, 0.0
  %v1188 = vmax.f32 %v1100, 0.0
  %v1189 = vmax.f32 %v1101, 0.0
  %v1190 = vmax.f32 %v1102, 0.0
  %v1191 = vmax.f32 %v1103, 0.0
  %v1192 = vmax.f32 %v1104, 0.0
  %v1193 = vmax.f32 %v1105, 0.0
  %v1194 = vmax.f32 %v1106, 0.0
  %v1195 = vmax.f32 %v1107, 0.0
  %v1196 = vmax.f32 %v1108, 0.0
  %v1197 = vmax.f32 %v1109, 0.0
  %v1198 = vmax.f32 %v1110, 0.0
  %v1199 = vmax.f32 %v1111, 0.0
  %v1200 = vmax.f32 %v1112, 0.0
  %v1201 = vmax.f32 %v1113, 0.0
  %v1202 = vmax.f32 %v1114, 0.0
  %v1203 = vmax.f32 %v1115, 0.0
  %v1204 = vmax.f32 %v1116, 0.0
  %v1205 = vmax.f32 %v1117, 0.0
  %v1206 = vmax.f32 %v1118, 0.0
  %v1207 = vmax.f32 %v1119, 0.0
  %v1208 = vmax.f32 %v1120, 0.0
  %v1209 = vmax.f32 %v1121, 0.0
  %v1210 = vmax.f32 %v1122, 0.0
  %v1211 = vmax.f32 %v1123, 0.0
  %v1212 = vmax.f32 %v1124, 0.0
  %v1213 = vmax.f32 %v1125, 0.0
  %v1214 = vmax.f32 %v1126, 0.0
  %v1215 = vmax.f32 %v1127, 0.0
  %v1216 = vmax.f32 %v1128, 0.0
  %v1217 = vmax.f32 %v1129, 0.0
  %v1218 = vmax.f32 %v1130, 0.0
  %v1219 = vmax.f32 %v1131, 0.0
  %v1220 = vmax.f32 %v1132, 0.0
  %v1221 = vmax.f32 %v1133, 0.0
  %v1222 = vmax.f32 %v1134, 0.0
  %v1223 = vmax.f32 %v1135, 0.0
  %v1224 = vmax.f32 %v1136, 0.0
  %v1225 = vmax.f32 %v1137, 0.0
  %v1226 = vmax.f32 %v1138, 0.0
  %v1227 = vmax.f32 %v1139, 0.0
  %v1228 = vmax.f32 %v1140, 0.0
  %v1229 = vmax.f32 %v1141, 0.0
  %v1230 = vmax.f32 %v1142, 0.0
  %v1231 = vmax.f32 %v1143, 0.0
  %v1232 = vmax.f32 %v1144, 0.0
  %v1233 = vmax.f32 %v1145, 0.0
  %v1234 = vmax.f32 %v1146, 0.0
  %v1235 = vmax.f32 %v1147, 0.0
  %v1236 = vmax.f32 %v1148, 0.0
  %v1237 = vmax.f32 %v1149, 0.0
  %v1238 = vmax.f32 %v1150, 0.0
  %v1239 = vmax.f32 %v1151, 0.0
  %v1240 = vmax.f32 %v1152, 0.0
  %v1241 = vmax.f32 %v1153, 0.0
  %v1242 = vmax.f32 %v1154, 0.0
  %v1243 = vmax.f32 %v1155, 0.0
  %v1244 = vmax.f32 %v1156, 0.0
  %v1245 = vmax.f32 %v1157, 0.0
  %v1246 = vmax.f32 %v1158, 0.0
  %v1247 = vmax.f32 %v1159, 0.0
  %v1248 = vmax.f32 %v1160, 0.0
  %v1249 = vmax.f32 %v1161, 0.0
  %v1250 = vmax.f32 %v1162, 0.0
  %v1251 = vmax.f32 %v1163, 0.0
  %v1252 = vmax.f32 %v1164, 0.0
  %v1253 = vmax.f32 %v1165, 0.0
  %v1254 = vmax.f32 %v1166, 0.0
  %v1255 = vmax.f32 %v1167, 0.0
  %v1256 = vmax.f32 %v1168, 0.0
  %v1257 = vmax.f32 %v1169, 0.0
  %v1258 = vmax.f32 %v1170, 0.0
  %v1259 = vmax.f32 %v1171, 0.0
  %v1260 = vmax.f32 %v1172, 0.0
  %v1261 = vmax.f32 %v1173, 0.0
  %v1262 = vmax.f32 %v1174, 0.0
  %v1263 = vmax.f32 %v1175, 0.0
  %v1264 = vmax.f32 %v1176, 0.0
  %v1265 = vld [vmem:[%s1] sm:$0xff]
  %v1266 = vld [vmem:[%s1 + $0x8] sm:$0xff]
  %v1267 = vld [vmem:[%s1 + $0x10] sm:$0xff]
  %v1268 = vld [vmem:[%s1 + $0x18] sm:$0xff]
  %v1269 = vld [vmem:[%s1 + $0x20] sm:$0xff]
  %v1270 = vld [vmem:[%s1 + $0x28] sm:$0xff]
  %v1271 = vld [vmem:[%s1 + $0x30] sm:$0xff]
  %v1272 = vld [vmem:[%s1 + $0x38] sm:$0xff]
  %v1273 = vld [vmem:[%s1 + $0x40] sm:$0xff]
  %v1274 = vld [vmem:[%s1 + $0x48] sm:$0xff]
  %v1275 = vld [vmem:[%s1 + $0x50] sm:$0xff]
  %v1276 = vld [vmem:[%s1 + $0x58] sm:$0xff]
  %v1277 = vld [vmem:[%s1 + $0x60] sm:$0xff]
  %v1278 = vld [vmem:[%s1 + $0x68] sm:$0xff]
  %v1279 = vld [vmem:[%s1 + $0x70] sm:$0xff]
  %v1280 = vld [vmem:[%s1 + $0x78] sm:$0xff]
  %v1281 = vld [vmem:[%s1 + $0x80] sm:$0xff]
  %v1282 = vld [vmem:[%s1 + $0x88] sm:$0xff]
  %v1283 = vld [vmem:[%s1 + $0x90] sm:$0xff]
  %v1284 = vld [vmem:[%s1 + $0x98] sm:$0xff]
  %v1285 = vld [vmem:[%s1 + $0xa0] sm:$0xff]
  %v1286 = vld [vmem:[%s1 + $0xa8] sm:$0xff]
  %v1287 = vld [vmem:[%s1 + $0xb0] sm:$0xff]
  %v1288 = vld [vmem:[%s1 + $0xb8] sm:$0xff]
  %v1289 = vld [vmem:[%s1 + $0xc0] sm:$0xff]
  %v1290 = vld [vmem:[%s1 + $0xc8] sm:$0xff]
  %v1291 = vld [vmem:[%s1 + $0xd0] sm:$0xff]
  %v1292 = vld [vmem:[%s1 + $0xd8] sm:$0xff]
  %v1293 = vld [vmem:[%s1 + $0xe0] sm:$0xff]
  %v1294 = vld [vmem:[%s1 + $0xe8] sm:$0xff]
  %v1295 = vld [vmem:[%s1 + $0xf0] sm:$0xff]
  %v1296 = vld [vmem:[%s1 + $0xf8] sm:$0xff]
  %v1297 = vld [vmem:[%s1 + $0x100] sm:$0xff]
  %v1298 = vld [vmem:[%s1 + $0x108] sm:$0xff]
  %v1299 = vld [vmem:[%s1 + $0x110] sm:$0xff]
  %v1300 = vld [vmem:[%s1 + $0x118] sm:$0xff]
  %v1301 = vld [vmem:[%s1 + $0x120] sm:$0xff]
  %v1302 = vld [vmem:[%s1 + $0x128] sm:$0xff]
  %v1303 = vld [vmem:[%s1 + $0x130] sm:$0xff]
  %v1304 = vld [vmem:[%s1 + $0x138] sm:$0xff]
  %v1305 = vld [vmem:[%s1 + $0x140] sm:$0xff]
  %v1306 = vld [vmem:[%s1 + $0x148] sm:$0xff]
  %v1307 = vld [vmem:[%s1 + $0x150] sm:$0xff]
  %v1308 = vld [vmem:[%s1 + $0x158] sm:$0xff]
  %v1309 = vld [vmem:[%s1 + $0x160] sm:$0xff]
  %v1310 = vld [vmem:[%s1 + $0x168] sm:$0xff]
  %v1311 = vld [vmem:[%s1 + $0x170] sm:$0xff]
  %v1312 = vld [vmem:[%s1 + $0x178] sm:$0xff]
  %v1313 = vld [vmem:[%s1 + $0x180] sm:$0xff]
  %v1314 = vld [vmem:[%s1 + $0x188] sm:$0xff]
  %v1315 = vld [vmem:[%s1 + $0x190] sm:$0xff]
  %v1316 = vld [vmem:[%s1 + $0x198] sm:$0xff]
  %v1317 = vld [vmem:[%s1 + $0x1a0] sm:$0xff]
  %v1318 = vld [vmem:[%s1 + $0x1a8] sm:$0xff]
  %v1319 = vld [vmem:[%s1 + $0x1b0] sm:$0xff]
  %v1320 = vld [vmem:[%s1 + $0x1b8] sm:$0xff]
  %v1321 = vld [vmem:[%s1 + $0x1c0] sm:$0xff]
  %v1322 = vld [vmem:[%s1 + $0x1c8] sm:$0xff]
  %v1323 = vld [vmem:[%s1 + $0x1d0] sm:$0xff]
  %v1324 = vld [vmem:[%s1 + $0x1d8] sm:$0xff]
  %v1325 = vld [vmem:[%s1 + $0x1e0] sm:$0xff]
  %v1326 = vld [vmem:[%s1 + $0x1e8] sm:$0xff]
  %v1327 = vld [vmem:[%s1 + $0x1f0] sm:$0xff]
  %v1328 = vld [vmem:[%s1 + $0x1f8] sm:$0xff]
  %v1329 = vld [vmem:[%s1 + $0x200] sm:$0xff]
  %v1330 = vld [vmem:[%s1 + $0x208] sm:$0xff]
  %v1331 = vld [vmem:[%s1 + $0x210] sm:$0xff]
  %v1332 = vld [vmem:[%s1 + $0x218] sm:$0xff]
  %v1333 = vld [vmem:[%s1 + $0x220] sm:$0xff]
  %v1334 = vld [vmem:[%s1 + $0x228] sm:$0xff]
  %v1335 = vld [vmem:[%s1 + $0x230] sm:$0xff]
  %v1336 = vld [vmem:[%s1 + $0x238] sm:$0xff]
  %v1337 = vld [vmem:[%s1 + $0x240] sm:$0xff]
  %v1338 = vld [vmem:[%s1 + $0x248] sm:$0xff]
  %v1339 = vld [vmem:[%s1 + $0x250] sm:$0xff]
  %v1340 = vld [vmem:[%s1 + $0x258] sm:$0xff]
  %v1341 = vld [vmem:[%s1 + $0x260] sm:$0xff]
  %v1342 = vld [vmem:[%s1 + $0x268] sm:$0xff]
  %v1343 = vld [vmem:[%s1 + $0x270] sm:$0xff]
  %v1344 = vld [vmem:[%s1 + $0x278] sm:$0xff]
  %v1345 = vld [vmem:[%s1 + $0x280] sm:$0xff]
  %v1346 = vld [vmem:[%s1 + $0x288] sm:$0xff]
  %v1347 = vld [vmem:[%s1 + $0x290] sm:$0xff]
  %v1348 = vld [vmem:[%s1 + $0x298] sm:$0xff]
  %v1349 = vld [vmem:[%s1 + $0x2a0] sm:$0xff]
  %v1350 = vld [vmem:[%s1 + $0x2a8] sm:$0xff]
  %v1351 = vld [vmem:[%s1 + $0x2b0] sm:$0xff]
  %v1352 = vld [vmem:[%s1 + $0x2b8] sm:$0xff]
  %v1353 = vld [vmem:[%s1 + $0x2c0] sm:$0xff]
  %v1354 = vld [vmem:[%s1 + $0x2c8] sm:$0xff]
  %v1355 = vld [vmem:[%s1 + $0x2d0] sm:$0xff]
  %v1356 = vld [vmem:[%s1 + $0x2d8] sm:$0xff]
  %v1357 = vld [vmem:[%s1 + $0x2e0] sm:$0xff]
  %v1358 = vld [vmem:[%s1 + $0x2e8] sm:$0xff]
  %v1359 = vld [vmem:[%s1 + $0x2f0] sm:$0xff]
  %v1360 = vld [vmem:[%s1 + $0x2f8] sm:$0xff]
  %vm1361 = vcmask 523264
  %v1363 = vsel %vm1361, %v1270, 0
  %v1366 = vsel %vm1361, %v1276, 0
  %v1369 = vsel %vm1361, %v1282, 0
  %v1372 = vsel %vm1361, %v1288, 0
  %v1375 = vsel %vm1361, %v1294, 0
  %v1378 = vsel %vm1361, %v1300, 0
  %v1381 = vsel %vm1361, %v1306, 0
  %v1384 = vsel %vm1361, %v1312, 0
  %v1387 = vsel %vm1361, %v1318, 0
  %v1390 = vsel %vm1361, %v1324, 0
  %v1393 = vsel %vm1361, %v1330, 0
  %v1396 = vsel %vm1361, %v1336, 0
  %v1399 = vsel %vm1361, %v1342, 0
  %v1402 = vsel %vm1361, %v1348, 0
  %v1405 = vsel %vm1361, %v1354, 0
  %v1408 = vsel %vm1361, %v1360, 0
  %1410 = vmatprep.subr.mxu0 0.0
  %1411 = vmatpush1.msra.mxu0 %v1177
  %1412 = vmatprep.subr.mxu0 0.0
  %1413 = vmatpush1.msra.mxu0 %v1178
  %1414 = vmatprep.subr.mxu0 0.0
  %1415 = vmatpush1.msra.mxu0 %v1179
  %1416 = vmatprep.subr.mxu0 0.0
  %1417 = vmatpush1.msra.mxu0 %v1180
  %1418 = vmatprep.subr.mxu0 0.0
  %1419 = vmatpush1.msra.mxu0 %v1181
  %1420 = vmatprep.subr.mxu0 0.0
  %1421 = vmatpush1.msra.mxu0 %v1182
  %1422 = vmatprep.subr.mxu0 0.0
  %1423 = vmatpush1.msra.mxu0 %v1183
  %1424 = vmatprep.subr.mxu0 0.0
  %1425 = vmatpush1.msra.mxu0 %v1184
  %1426 = vmatprep.subr.mxu0 0.0
  %1427 = vmatpush1.msra.mxu0 %v1185
  %1428 = vmatprep.subr.mxu0 0.0
  %1429 = vmatpush1.msra.mxu0 %v1186
  %1430 = vmatprep.subr.mxu0 0.0
  %1431 = vmatpush1.msra.mxu0 %v1187
  %1432 = vmatprep.subr.mxu0 0.0
  %1433 = vmatpush1.msra.mxu0 %v1188
  %1434 = vmatprep.subr.mxu0 0.0
  %1435 = vmatpush1.msra.mxu0 %v1189
  %1436 = vmatprep.subr.mxu0 0.0
  %1437 = vmatpush1.msra.mxu0 %v1190
  %1438 = vmatprep.subr.mxu0 0.0
  %1439 = vmatpush1.msra.mxu0 %v1191
  %1440 = vmatprep.subr.mxu0 0.0
  %1441 = vmatpush1.msra.mxu0 %v1192
  %1442 = vmatprep.subr.mxu0 0.0
  %1443 = vmatpush1.msra.mxu0 %v1193
  %1444 = vmatprep.subr.mxu0 0.0
  %1445 = vmatpush1.msra.mxu0 %v1194
  %1446 = vmatprep.subr.mxu0 0.0
  %1447 = vmatpush1.msra.mxu0 %v1195
  %1448 = vmatprep.subr.mxu0 0.0
  %1449 = vmatpush1.msra.mxu0 %v1196
  %1450 = vmatprep.subr.mxu0 0.0
  %1451 = vmatpush1.msra.mxu0 %v1197
  %1452 = vmatprep.subr.mxu0 0.0
  %1453 = vmatpush1.msra.mxu0 %v1198
  %1454 = vmatprep.subr.mxu0 0.0
  %1455 = vmatpush1.msra.mxu0 %v1199
  %1456 = vmatprep.subr.mxu0 0.0
  %1457 = vmatpush1.msra.mxu0 %v1200
  %1458 = vmatprep.subr.mxu0 0.0
  %1459 = vmatpush1.msra.mxu0 %v1201
  %1460 = vmatprep.subr.mxu0 0.0
  %1461 = vmatpush1.msra.mxu0 %v1202
  %1462 = vmatprep.subr.mxu0 0.0
  %1463 = vmatpush1.msra.mxu0 %v1203
  %1464 = vmatprep.subr.mxu0 0.0
  %1465 = vmatpush1.msra.mxu0 %v1204
  %1466 = vmatprep.subr.mxu0 0.0
  %1467 = vmatpush1.msra.mxu0 %v1205
  %1468 = vmatprep.subr.mxu0 0.0
  %1469 = vmatpush1.msra.mxu0 %v1206
  %1470 = vmatprep.subr.mxu0 0.0
  %1471 = vmatpush1.msra.mxu0 %v1207
  %1472 = vmatprep.subr.mxu0 0.0
  %1473 = vmatpush1.msra.mxu0 %v1208
  %1474 = vmatprep.mubr.f32.mxu0 %v1266
  %1475 = vmatmul.mubr.f32.gmra.mrb[0].mxu0 %v1265
  %v1476 = vpop.f32.mrb[0].mxu0
  %v1477 = vadd.f32 0.0, %v1476
  %v1478 = vpop.f32.mrb[0].mxu0
  %1479 = vmatprep.mubr.f32.mxu0 %v1272
  %1480 = vmatmul.mubr.f32.gmra.mrb[0].mxu0 %v1271
  %v1481 = vpop.f32.mrb[0].mxu0
  %v1482 = vadd.f32 0.0, %v1481
  %v1483 = vpop.f32.mrb[0].mxu0
  %1484 = vmatprep.mubr.f32.mxu0 %v1278
  %1485 = vmatmul.mubr.f32.gmra.mrb[0].mxu0 %v1277
  %v1486 = vpop.f32.mrb[0].mxu0
  %v1487 = vadd.f32 0.0, %v1486
  %v1488 = vpop.f32.mrb[0].mxu0
  %1489 = vmatprep.mubr.f32.mxu0 %v1284
  %1490 = vmatmul.mubr.f32.gmra.mrb[0].mxu0 %v1283
  %v1491 = vpop.f32.mrb[0].mxu0
  %v1492 = vadd.f32 0.0, %v1491
  %v1493 = vpop.f32.mrb[0].mxu0
  %1494 = vmatprep.mubr.f32.mxu0 %v1290
  %1495 = vmatmul.mubr.f32.gmra.mrb[0].mxu0 %v1289
  %v1496 = vpop.f32.mrb[0].mxu0
  %v1497 = vadd.f32 0.0, %v1496
  %v1498 = vpop.f32.mrb[0].mxu0
  %1499 = vmatprep.mubr.f32.mxu0 %v1296
  %1500 = vmatmul.mubr.f32.gmra.mrb[0].mxu0 %v1295
  %v1501 = vpop.f32.mrb[0].mxu0
  %v1502 = vadd.f32 0.0, %v1501
  %v1503 = vpop.f32.mrb[0].mxu0
  %1504 = vmatprep.mubr.f32.mxu0 %v1302
  %1505 = vmatmul.mubr.f32.gmra.mrb[0].mxu0 %v1301
  %v1506 = vpop.f32.mrb[0].mxu0
  %v1507 = vadd.f32 0.0, %v1506
  %v1508 = vpop.f32.mrb[0].mxu0
  %1509 = vmatprep.mubr.f32.mxu0 %v1308
  %1510 = vmatmul.mubr.f32.gmra.mrb[0].mxu0 %v1307
  %v1511 = vpop.f32.mrb[0].mxu0
  %v1512 = vadd.f32 0.0, %v1511
  %v1513 = vpop.f32.mrb[0].mxu0
  %1514 = vmatprep.mubr.f32.mxu0 %v1314
  %1515 = vmatmul.mubr.f32.gmra.mrb[0].mxu0 %v1313
  %v1516 = vpop.f32.mrb[0].mxu0
  %v1517 = vadd.f32 0.0, %v1516
  %v1518 = vpop.f32.mrb[0].mxu0
  %1519 = vmatprep.mubr.f32.mxu0 %v1320
  %1520 = vmatmul.mubr.f32.gmra.mrb[0].mxu0 %v1319
  %v1521 = vpop.f32.mrb[0].mxu0
  %v1522 = vadd.f32 0.0, %v1521
  %v1523 = vpop.f32.mrb[0].mxu0
  %1524 = vmatprep.mubr.f32.mxu0 %v1326
  %1525 = vmatmul.mubr.f32.gmra.mrb[0].mxu0 %v1325
  %v1526 = vpop.f32.mrb[0].mxu0
  %v1527 = vadd.f32 0.0, %v1526
  %v1528 = vpop.f32.mrb[0].mxu0
  %1529 = vmatprep.mubr.f32.mxu0 %v1332
  %1530 = vmatmul.mubr.f32.gmra.mrb[0].mxu0 %v1331
  %v1531 = vpop.f32.mrb[0].mxu0
  %v1532 = vadd.f32 0.0, %v1531
  %v1533 = vpop.f32.mrb[0].mxu0
  %1534 = vmatprep.mubr.f32.mxu0 %v1338
  %1535 = vmatmul.mubr.f32.gmra.mrb[0].mxu0 %v1337
  %v1536 = vpop.f32.mrb[0].mxu0
  %v1537 = vadd.f32 0.0, %v1536
  %v1538 = vpop.f32.mrb[0].mxu0
  %1539 = vmatprep.mubr.f32.mxu0 %v1344
  %1540 = vmatmul.mubr.f32.gmra.mrb[0].mxu0 %v1343
  %v1541 = vpop.f32.mrb[0].mxu0
  %v1542 = vadd.f32 0.0, %v1541
  %v1543 = vpop.f32.mrb[0].mxu0
  %1544 = vmatprep.mubr.f32.mxu0 %v1350
  %1545 = vmatmul.mubr.f32.gmra.mrb[0].mxu0 %v1349
  %v1546 = vpop.f32.mrb[0].mxu0
  %v1547 = vadd.f32 0.0, %v1546
  %v1548 = vpop.f32.mrb[0].mxu0
  %1549 = vmatprep.mubr.f32.mxu0 %v1356
  %1550 = vmatmul.mubr.f32.gmra.mrb[0].mxu0 %v1355
  %v1551 = vpop.f32.mrb[0].mxu0
  %v1552 = vadd.f32 0.0, %v1551
  %v1553 = vpop.f32.mrb[0].mxu0
  %1554 = vdwg.mxu0
  %1555 = vmatprep.subr.mxu0 0.0
  %1556 = vmatpush1.msra.mxu0 %v1209
  %1557 = vmatprep.subr.mxu0 0.0
  %1558 = vmatpush1.msra.mxu0 %v1210
  %1559 = vmatprep.subr.mxu0 0.0
  %1560 = vmatpush1.msra.mxu0 %v1211
  %1561 = vmatprep.subr.mxu0 0.0
  %1562 = vmatpush1.msra.mxu0 %v1212
  %1563 = vmatprep.subr.mxu0 0.0
  %1564 = vmatpush1.msra.mxu0 %v1213
  %1565 = vmatprep.subr.mxu0 0.0
  %1566 = vmatpush1.msra.mxu0 %v1214
  %1567 = vmatprep.subr.mxu0 0.0
  %1568 = vmatpush1.msra.mxu0 %v1215
  %1569 = vmatprep.subr.mxu0 0.0
  %1570 = vmatpush1.msra.mxu0 %v1216
  %1571 = vmatprep.subr.mxu0 0.0
  %1572 = vmatpush1.msra.mxu0 %v1217
  %1573 = vmatprep.subr.mxu0 0.0
  %1574 = vmatpush1.msra.mxu0 %v1218
  %1575 = vmatprep.subr.mxu0 0.0
  %1576 = vmatpush1.msra.mxu0 %v1219
  %1577 = vmatprep.subr.mxu0 0.0
  %1578 = vmatpush1.msra.mxu0 %v1220
  %1579 = vmatprep.subr.mxu0 0.0
  %1580 = vmatpush1.msra.mxu0 %v1221
  %1581 = vmatprep.subr.mxu0 0.0
  %1582 = vmatpush1.msra.mxu0 %v1222
  %1583 = vmatprep.subr.mxu0 0.0
  %1584 = vmatpush1.msra.mxu0 %v1223
  %1585 = vmatprep.subr.mxu0 0.0
  %1586 = vmatpush1.msra.mxu0 %v1224
  %1587 = vmatprep.subr.mxu0 0.0
  %1588 = vmatpush1.msra.mxu0 %v1225
  %1589 = vmatprep.subr.mxu0 0.0
  %1590 = vmatpush1.msra.mxu0 %v1226
  %1591 = vmatprep.subr.mxu0 0.0
  %1592 = vmatpush1.msra.mxu0 %v1227
  %1593 = vmatprep.subr.mxu0 0.0
  %1594 = vmatpush1.msra.mxu0 %v1228
  %1595 = vmatprep.subr.mxu0 0.0
  %1596 = vmatpush1.msra.mxu0 %v1229
  %1597 = vmatprep.subr.mxu0 0.0
  %1598 = vmatpush1.msra.mxu0 %v1230
  %1599 = vmatprep.subr.mxu0 0.0
  %1600 = vmatpush1.msra.mxu0 %v1231
  %1601 = vmatprep.subr.mxu0 0.0
  %1602 = vmatpush1.msra.mxu0 %v1232
  %1603 = vmatprep.subr.mxu0 0.0
  %1604 = vmatpush1.msra.mxu0 %v1233
  %1605 = vmatprep.subr.mxu0 0.0
  %1606 = vmatpush1.msra.mxu0 %v1234
  %1607 = vmatprep.subr.mxu0 0.0
  %1608 = vmatpush1.msra.mxu0 %v1235
  %1609 = vmatprep.subr.mxu0 0.0
  %1610 = vmatpush1.msra.mxu0 %v1236
  %1611 = vmatprep.subr.mxu0 0.0
  %1612 = vmatpush1.msra.mxu0 %v1237
  %1613 = vmatprep.subr.mxu0 0.0
  %1614 = vmatpush1.msra.mxu0 %v1238
  %1615 = vmatprep.subr.mxu0 0.0
  %1616 = vmatpush1.msra.mxu0 %v1239
  %1617 = vmatprep.subr.mxu0 0.0
  %1618 = vmatpush1.msra.mxu0 %v1240
  %1619 = vmatprep.mubr.f32.mxu0 %v1268
  %1620 = vmatmul.mubr.f32.gmra.mrb[0].mxu0 %v1267
  %v1621 = vpop.f32.mrb[0].mxu0
  %v1622 = vadd.f32 %v1477, %v1621
  %v1623 = vpop.f32.mrb[0].mxu0
  %1624 = vmatprep.mubr.f32.mxu0 %v1274
  %1625 = vmatmul.mubr.f32.gmra.mrb[0].mxu0 %v1273
  %v1626 = vpop.f32.mrb[0].mxu0
  %v1627 = vadd.f32 %v1482, %v1626
  %v1628 = vpop.f32.mrb[0].mxu0
  %1629 = vmatprep.mubr.f32.mxu0 %v1280
  %1630 = vmatmul.mubr.f32.gmra.mrb[0].mxu0 %v1279
  %v1631 = vpop.f32.mrb[0].mxu0
  %v1632 = vadd.f32 %v1487, %v1631
  %v1633 = vpop.f32.mrb[0].mxu0
  %1634 = vmatprep.mubr.f32.mxu0 %v1286
  %1635 = vmatmul.mubr.f32.gmra.mrb[0].mxu0 %v1285
  %v1636 = vpop.f32.mrb[0].mxu0
  %v1637 = vadd.f32 %v1492, %v1636
  %v1638 = vpop.f32.mrb[0].mxu0
  %1639 = vmatprep.mubr.f32.mxu0 %v1292
  %1640 = vmatmul.mubr.f32.gmra.mrb[0].mxu0 %v1291
  %v1641 = vpop.f32.mrb[0].mxu0
  %v1642 = vadd.f32 %v1497, %v1641
  %v1643 = vpop.f32.mrb[0].mxu0
  %1644 = vmatprep.mubr.f32.mxu0 %v1298
  %1645 = vmatmul.mubr.f32.gmra.mrb[0].mxu0 %v1297
  %v1646 = vpop.f32.mrb[0].mxu0
  %v1647 = vadd.f32 %v1502, %v1646
  %v1648 = vpop.f32.mrb[0].mxu0
  %1649 = vmatprep.mubr.f32.mxu0 %v1304
  %1650 = vmatmul.mubr.f32.gmra.mrb[0].mxu0 %v1303
  %v1651 = vpop.f32.mrb[0].mxu0
  %v1652 = vadd.f32 %v1507, %v1651
  %v1653 = vpop.f32.mrb[0].mxu0
  %1654 = vmatprep.mubr.f32.mxu0 %v1310
  %1655 = vmatmul.mubr.f32.gmra.mrb[0].mxu0 %v1309
  %v1656 = vpop.f32.mrb[0].mxu0
  %v1657 = vadd.f32 %v1512, %v1656
  %v1658 = vpop.f32.mrb[0].mxu0
  %1659 = vmatprep.mubr.f32.mxu0 %v1316
  %1660 = vmatmul.mubr.f32.gmra.mrb[0].mxu0 %v1315
  %v1661 = vpop.f32.mrb[0].mxu0
  %v1662 = vadd.f32 %v1517, %v1661
  %v1663 = vpop.f32.mrb[0].mxu0
  %1664 = vmatprep.mubr.f32.mxu0 %v1322
  %1665 = vmatmul.mubr.f32.gmra.mrb[0].mxu0 %v1321
  %v1666 = vpop.f32.mrb[0].mxu0
  %v1667 = vadd.f32 %v1522, %v1666
  %v1668 = vpop.f32.mrb[0].mxu0
  %1669 = vmatprep.mubr.f32.mxu0 %v1328
  %1670 = vmatmul.mubr.f32.gmra.mrb[0].mxu0 %v1327
  %v1671 = vpop.f32.mrb[0].mxu0
  %v1672 = vadd.f32 %v1527, %v1671
  %v1673 = vpop.f32.mrb[0].mxu0
  %1674 = vmatprep.mubr.f32.mxu0 %v1334
  %1675 = vmatmul.mubr.f32.gmra.mrb[0].mxu0 %v1333
  %v1676 = vpop.f32.mrb[0].mxu0
  %v1677 = vadd.f32 %v1532, %v1676
  %v1678 = vpop.f32.mrb[0].mxu0
  %1679 = vmatprep.mubr.f32.mxu0 %v1340
  %1680 = vmatmul.mubr.f32.gmra.mrb[0].mxu0 %v1339
  %v1681 = vpop.f32.mrb[0].mxu0
  %v1682 = vadd.f32 %v1537, %v1681
  %v1683 = vpop.f32.mrb[0].mxu0
  %1684 = vmatprep.mubr.f32.mxu0 %v1346
  %1685 = vmatmul.mubr.f32.gmra.mrb[0].mxu0 %v1345
  %v1686 = vpop.f32.mrb[0].mxu0
  %v1687 = vadd.f32 %v1542, %v1686
  %v1688 = vpop.f32.mrb[0].mxu0
  %1689 = vmatprep.mubr.f32.mxu0 %v1352
  %1690 = vmatmul.mubr.f32.gmra.mrb[0].mxu0 %v1351
  %v1691 = vpop.f32.mrb[0].mxu0
  %v1692 = vadd.f32 %v1547, %v1691
  %v1693 = vpop.f32.mrb[0].mxu0
  %1694 = vmatprep.mubr.f32.mxu0 %v1358
  %1695 = vmatmul.mubr.f32.gmra.mrb[0].mxu0 %v1357
  %v1696 = vpop.f32.mrb[0].mxu0
  %v1697 = vadd.f32 %v1552, %v1696
  %v1698 = vpop.f32.mrb[0].mxu0
  %1699 = vdwg.mxu0
  %1700 = vmatprep.subr.mxu0 0.0
  %1701 = vmatpush1.msra.mxu0 %v1241
  %1702 = vmatprep.subr.mxu0 0.0
  %1703 = vmatpush1.msra.mxu0 %v1242
  %1704 = vmatprep.subr.mxu0 0.0
  %1705 = vmatpush1.msra.mxu0 %v1243
  %1706 = vmatprep.subr.mxu0 0.0
  %1707 = vmatpush1.msra.mxu0 %v1244
  %1708 = vmatprep.subr.mxu0 0.0
  %1709 = vmatpush1.msra.mxu0 %v1245
  %1710 = vmatprep.subr.mxu0 0.0
  %1711 = vmatpush1.msra.mxu0 %v1246
  %1712 = vmatprep.subr.mxu0 0.0
  %1713 = vmatpush1.msra.mxu0 %v1247
  %1714 = vmatprep.subr.mxu0 0.0
  %1715 = vmatpush1.msra.mxu0 %v1248
  %1716 = vmatprep.subr.mxu0 0.0
  %1717 = vmatpush1.msra.mxu0 %v1249
  %1718 = vmatprep.subr.mxu0 0.0
  %1719 = vmatpush1.msra.mxu0 %v1250
  %1720 = vmatprep.subr.mxu0 0.0
  %1721 = vmatpush1.msra.mxu0 %v1251
  %1722 = vmatprep.subr.mxu0 0.0
  %1723 = vmatpush1.msra.mxu0 %v1252
  %1724 = vmatprep.subr.mxu0 0.0
  %1725 = vmatpush1.msra.mxu0 %v1253
  %1726 = vmatprep.subr.mxu0 0.0
  %1727 = vmatpush1.msra.mxu0 %v1254
  %1728 = vmatprep.subr.mxu0 0.0
  %1729 = vmatpush1.msra.mxu0 %v1255
  %1730 = vmatprep.subr.mxu0 0.0
  %1731 = vmatpush1.msra.mxu0 %v1256
  %1732 = vmatprep.subr.mxu0 0.0
  %1733 = vmatpush1.msra.mxu0 %v1257
  %1734 = vmatprep.subr.mxu0 0.0
  %1735 = vmatpush1.msra.mxu0 %v1258
  %1736 = vmatprep.subr.mxu0 0.0
  %1737 = vmatpush1.msra.mxu0 %v1259
  %1738 = vmatprep.subr.mxu0 0.0
  %1739 = vmatpush1.msra.mxu0 %v1260
  %1740 = vmatprep.subr.mxu0 0.0
  %1741 = vmatpush1.msra.mxu0 %v1261
  %1742 = vmatprep.subr.mxu0 0.0
  %1743 = vmatpush1.msra.mxu0 %v1262
  %1744 = vmatprep.subr.mxu0 0.0
  %1745 = vmatpush1.msra.mxu0 %v1263
  %1746 = vmatprep.subr.mxu0 0.0
  %1747 = vmatpush1.msra.mxu0 %v1264
  %1748 = vmatprep.subr.mxu0 0.0
  %1749 = vmatpush1.msra.mxu0 0.0
  %1750 = vmatprep.subr.mxu0 0.0
  %1751 = vmatpush1.msra.mxu0 0.0
  %1752 = vmatprep.subr.mxu0 0.0
  %1753 = vmatpush1.msra.mxu0 0.0
  %1754 = vmatprep.subr.mxu0 0.0
  %1755 = vmatpush1.msra.mxu0 0.0
  %1756 = vmatprep.subr.mxu0 0.0
  %1757 = vmatpush1.msra.mxu0 0.0
  %1758 = vmatprep.subr.mxu0 0.0
  %1759 = vmatpush1.msra.mxu0 0.0
  %1760 = vmatprep.subr.mxu0 0.0
  %1761 = vmatpush1.msra.mxu0 0.0
  %1762 = vmatprep.subr.mxu0 0.0
  %1763 = vmatpush1.msra.mxu0 0.0
  %1764 = vmatprep.mubr.f32.mxu0 %v1363
  %1765 = vmatmul.mubr.f32.gmra.mrb[0].mxu0 %v1269
  %v1766 = vpop.f32.mrb[0].mxu0
  %v1767 = vadd.f32 %v1622, %v1766
  %v1768 = vpop.f32.mrb[0].mxu0
  %1769 = vmatprep.mubr.f32.mxu0 %v1366
  %1770 = vmatmul.mubr.f32.gmra.mrb[0].mxu0 %v1275
  %v1771 = vpop.f32.mrb[0].mxu0
  %v1772 = vadd.f32 %v1627, %v1771
  %v1773 = vpop.f32.mrb[0].mxu0
  %1774 = vmatprep.mubr.f32.mxu0 %v1369
  %1775 = vmatmul.mubr.f32.gmra.mrb[0].mxu0 %v1281
  %v1776 = vpop.f32.mrb[0].mxu0
  %v1777 = vadd.f32 %v1632, %v1776
  %v1778 = vpop.f32.mrb[0].mxu0
  %1779 = vmatprep.mubr.f32.mxu0 %v1372
  %1780 = vmatmul.mubr.f32.gmra.mrb[0].mxu0 %v1287
  %v1781 = vpop.f32.mrb[0].mxu0
  %v1782 = vadd.f32 %v1637, %v1781
  %v1783 = vpop.f32.mrb[0].mxu0
  %1784 = vmatprep.mubr.f32.mxu0 %v1375
  %1785 = vmatmul.mubr.f32.gmra.mrb[0].mxu0 %v1293
  %v1786 = vpop.f32.mrb[0].mxu0
  %v1787 = vadd.f32 %v1642, %v1786
  %v1788 = vpop.f32.mrb[0].mxu0
  %1789 = vmatprep.mubr.f32.mxu0 %v1378
  %1790 = vmatmul.mubr.f32.gmra.mrb[0].mxu0 %v1299
  %v1791 = vpop.f32.mrb[0].mxu0
  %v1792 = vadd.f32 %v1647, %v1791
  %v1793 = vpop.f32.mrb[0].mxu0
  %1794 = vmatprep.mubr.f32.mxu0 %v1381
  %1795 = vmatmul.mubr.f32.gmra.mrb[0].mxu0 %v1305
  %v1796 = vpop.f32.mrb[0].mxu0
  %v1797 = vadd.f32 %v1652, %v1796
  %v1798 = vpop.f32.mrb[0].mxu0
  %1799 = vmatprep.mubr.f32.mxu0 %v1384
  %1800 = vmatmul.mubr.f32.gmra.mrb[0].mxu0 %v1311
  %v1801 = vpop.f32.mrb[0].mxu0
  %v1802 = vadd.f32 %v1657, %v1801
  %v1803 = vpop.f32.mrb[0].mxu0
  %1804 = vmatprep.mubr.f32.mxu0 %v1387
  %1805 = vmatmul.mubr.f32.gmra.mrb[0].mxu0 %v1317
  %v1806 = vpop.f32.mrb[0].mxu0
  %v1807 = vadd.f32 %v1662, %v1806
  %v1808 = vpop.f32.mrb[0].mxu0
  %1809 = vmatprep.mubr.f32.mxu0 %v1390
  %1810 = vmatmul.mubr.f32.gmra.mrb[0].mxu0 %v1323
  %v1811 = vpop.f32.mrb[0].mxu0
  %v1812 = vadd.f32 %v1667, %v1811
  %v1813 = vpop.f32.mrb[0].mxu0
  %1814 = vmatprep.mubr.f32.mxu0 %v1393
  %1815 = vmatmul.mubr.f32.gmra.mrb[0].mxu0 %v1329
  %v1816 = vpop.f32.mrb[0].mxu0
  %v1817 = vadd.f32 %v1672, %v1816
  %v1818 = vpop.f32.mrb[0].mxu0
  %1819 = vmatprep.mubr.f32.mxu0 %v1396
  %1820 = vmatmul.mubr.f32.gmra.mrb[0].mxu0 %v1335
  %v1821 = vpop.f32.mrb[0].mxu0
  %v1822 = vadd.f32 %v1677, %v1821
  %v1823 = vpop.f32.mrb[0].mxu0
  %1824 = vmatprep.mubr.f32.mxu0 %v1399
  %1825 = vmatmul.mubr.f32.gmra.mrb[0].mxu0 %v1341
  %v1826 = vpop.f32.mrb[0].mxu0
  %v1827 = vadd.f32 %v1682, %v1826
  %v1828 = vpop.f32.mrb[0].mxu0
  %1829 = vmatprep.mubr.f32.mxu0 %v1402
  %1830 = vmatmul.mubr.f32.gmra.mrb[0].mxu0 %v1347
  %v1831 = vpop.f32.mrb[0].mxu0
  %v1832 = vadd.f32 %v1687, %v1831
  %v1833 = vpop.f32.mrb[0].mxu0
  %1834 = vmatprep.mubr.f32.mxu0 %v1405
  %1835 = vmatmul.mubr.f32.gmra.mrb[0].mxu0 %v1353
  %v1836 = vpop.f32.mrb[0].mxu0
  %v1837 = vadd.f32 %v1692, %v1836
  %v1838 = vpop.f32.mrb[0].mxu0
  %1839 = vmatprep.mubr.f32.mxu0 %v1408
  %1840 = vmatmul.mubr.f32.gmra.mrb[0].mxu0 %v1359
  %v1841 = vpop.f32.mrb[0].mxu0
  %v1842 = vadd.f32 %v1697, %v1841
  %v1843 = vpop.f32.mrb[0].mxu0
  %1844 = vdwg.mxu0
  %1846 = vset.pattern.permute.xlu0 0
  %1847 = vperm.xlu0 %1846, %v105
  %v1848 = vpop.permute.xlu0 %1847
  %1851 = vset.pattern.permute.xlu0 0
  %1852 = vperm.xlu0 %1851, %v106
  %v1853 = vpop.permute.xlu0 %1852
  %1856 = vset.pattern.permute.xlu0 0
  %1857 = vperm.xlu0 %1856, %v107
  %v1858 = vpop.permute.xlu0 %1857
  %1861 = vset.pattern.permute.xlu0 0
  %1862 = vperm.xlu0 %1861, %v108
  %v1863 = vpop.permute.xlu0 %1862
  %1866 = vset.pattern.permute.xlu0 0
  %1867 = vperm.xlu0 %1866, %v109
  %v1868 = vpop.permute.xlu0 %1867
  %1871 = vset.pattern.permute.xlu0 0
  %1872 = vperm.xlu0 %1871, %v110
  %v1873 = vpop.permute.xlu0 %1872
  %1876 = vset.pattern.permute.xlu0 0
  %1877 = vperm.xlu0 %1876, %v111
  %v1878 = vpop.permute.xlu0 %1877
  %1881 = vset.pattern.permute.xlu0 0
  %1882 = vperm.xlu0 %1881, %v112
  %v1883 = vpop.permute.xlu0 %1882
  %1886 = vset.pattern.permute.xlu0 0
  %1887 = vperm.xlu0 %1886, %v113
  %v1888 = vpop.permute.xlu0 %1887
  %1891 = vset.pattern.permute.xlu0 0
  %1892 = vperm.xlu0 %1891, %v114
  %v1893 = vpop.permute.xlu0 %1892
  %1896 = vset.pattern.permute.xlu0 0
  %1897 = vperm.xlu0 %1896, %v115
  %v1898 = vpop.permute.xlu0 %1897
  %1901 = vset.pattern.permute.xlu0 0
  %1902 = vperm.xlu0 %1901, %v116
  %v1903 = vpop.permute.xlu0 %1902
  %1906 = vset.pattern.permute.xlu0 0
  %1907 = vperm.xlu0 %1906, %v117
  %v1908 = vpop.permute.xlu0 %1907
  %1911 = vset.pattern.permute.xlu0 0
  %1912 = vperm.xlu0 %1911, %v118
  %v1913 = vpop.permute.xlu0 %1912
  %1916 = vset.pattern.permute.xlu0 0
  %1917 = vperm.xlu0 %1916, %v119
  %v1918 = vpop.permute.xlu0 %1917
  %1921 = vset.pattern.permute.xlu0 0
  %1922 = vperm.xlu0 %1921, %v120
  %v1923 = vpop.permute.xlu0 %1922
  %v1925 = vmul.f32 %v1767, %v1848
  %v1926 = vmul.f32 %v1772, %v1853
  %v1927 = vmul.f32 %v1777, %v1858
  %v1928 = vmul.f32 %v1782, %v1863
  %v1929 = vmul.f32 %v1787, %v1868
  %v1930 = vmul.f32 %v1792, %v1873
  %v1931 = vmul.f32 %v1797, %v1878
  %v1932 = vmul.f32 %v1802, %v1883
  %v1933 = vmul.f32 %v1807, %v1888
  %v1934 = vmul.f32 %v1812, %v1893
  %v1935 = vmul.f32 %v1817, %v1898
  %v1936 = vmul.f32 %v1822, %v1903
  %v1937 = vmul.f32 %v1827, %v1908
  %v1938 = vmul.f32 %v1832, %v1913
  %v1939 = vmul.f32 %v1837, %v1918
  %v1940 = vmul.f32 %v1842, %v1923
  %1941 = vset.pattern.permute.xlu0 1
  %1942 = vperm.xlu0 %1941, %v105
  %v1943 = vpop.permute.xlu0 %1942
  %1945 = vset.pattern.permute.xlu0 1
  %1946 = vperm.xlu0 %1945, %v106
  %v1947 = vpop.permute.xlu0 %1946
  %1949 = vset.pattern.permute.xlu0 1
  %1950 = vperm.xlu0 %1949, %v107
  %v1951 = vpop.permute.xlu0 %1950
  %1953 = vset.pattern.permute.xlu0 1
  %1954 = vperm.xlu0 %1953, %v108
  %v1955 = vpop.permute.xlu0 %1954
  %1957 = vset.pattern.permute.xlu0 1
  %1958 = vperm.xlu0 %1957, %v109
  %v1959 = vpop.permute.xlu0 %1958
  %1961 = vset.pattern.permute.xlu0 1
  %1962 = vperm.xlu0 %1961, %v110
  %v1963 = vpop.permute.xlu0 %1962
  %1965 = vset.pattern.permute.xlu0 1
  %1966 = vperm.xlu0 %1965, %v111
  %v1967 = vpop.permute.xlu0 %1966
  %1969 = vset.pattern.permute.xlu0 1
  %1970 = vperm.xlu0 %1969, %v112
  %v1971 = vpop.permute.xlu0 %1970
  %1973 = vset.pattern.permute.xlu0 1
  %1974 = vperm.xlu0 %1973, %v113
  %v1975 = vpop.permute.xlu0 %1974
  %1977 = vset.pattern.permute.xlu0 1
  %1978 = vperm.xlu0 %1977, %v114
  %v1979 = vpop.permute.xlu0 %1978
  %1981 = vset.pattern.permute.xlu0 1
  %1982 = vperm.xlu0 %1981, %v115
  %v1983 = vpop.permute.xlu0 %1982
  %1985 = vset.pattern.permute.xlu0 1
  %1986 = vperm.xlu0 %1985, %v116
  %v1987 = vpop.permute.xlu0 %1986
  %1989 = vset.pattern.permute.xlu0 1
  %1990 = vperm.xlu0 %1989, %v117
  %v1991 = vpop.permute.xlu0 %1990
  %1993 = vset.pattern.permute.xlu0 1
  %1994 = vperm.xlu0 %1993, %v118
  %v1995 = vpop.permute.xlu0 %1994
  %1997 = vset.pattern.permute.xlu0 1
  %1998 = vperm.xlu0 %1997, %v119
  %v1999 = vpop.permute.xlu0 %1998
  %2001 = vset.pattern.permute.xlu0 1
  %2002 = vperm.xlu0 %2001, %v120
  %v2003 = vpop.permute.xlu0 %2002
  %v2005 = vadd.f32 %v1925, %v1943
  %v2006 = vadd.f32 %v1926, %v1947
  %v2007 = vadd.f32 %v1927, %v1951
  %v2008 = vadd.f32 %v1928, %v1955
  %v2009 = vadd.f32 %v1929, %v1959
  %v2010 = vadd.f32 %v1930, %v1963
  %v2011 = vadd.f32 %v1931, %v1967
  %v2012 = vadd.f32 %v1932, %v1971
  %v2013 = vadd.f32 %v1933, %v1975
  %v2014 = vadd.f32 %v1934, %v1979
  %v2015 = vadd.f32 %v1935, %v1983
  %v2016 = vadd.f32 %v1936, %v1987
  %v2017 = vadd.f32 %v1937, %v1991
  %v2018 = vadd.f32 %v1938, %v1995
  %v2019 = vadd.f32 %v1939, %v1999
  %v2020 = vadd.f32 %v1940, %v2003
  %v2021 = vmax.f32 %v2005, 0.0
  %v2022 = vmax.f32 %v2006, 0.0
  %v2023 = vmax.f32 %v2007, 0.0
  %v2024 = vmax.f32 %v2008, 0.0
  %v2025 = vmax.f32 %v2009, 0.0
  %v2026 = vmax.f32 %v2010, 0.0
  %v2027 = vmax.f32 %v2011, 0.0
  %v2028 = vmax.f32 %v2012, 0.0
  %v2029 = vmax.f32 %v2013, 0.0
  %v2030 = vmax.f32 %v2014, 0.0
  %v2031 = vmax.f32 %v2015, 0.0
  %v2032 = vmax.f32 %v2016, 0.0
  %v2033 = vmax.f32 %v2017, 0.0
  %v2034 = vmax.f32 %v2018, 0.0
  %v2035 = vmax.f32 %v2019, 0.0
  %v2036 = vmax.f32 %v2020, 0.0
  %vm2037 = vcmask 400384
  %2038 = vst.msk [vmem:[%s4] sm:$0xff] %vm2037, %v2021
  %2039 = vst.msk [vmem:[%s4 + $0x8] sm:$0xff] %vm2037, %v2022
  %2040 = vst.msk [vmem:[%s4 + $0x10] sm:$0xff] %vm2037, %v2023
  %2041 = vst.msk [vmem:[%s4 + $0x18] sm:$0xff] %vm2037, %v2024
  %2042 = vst.msk [vmem:[%s4 + $0x20] sm:$0xff] %vm2037, %v2025
  %2043 = vst.msk [vmem:[%s4 + $0x28] sm:$0xff] %vm2037, %v2026
  %2044 = vst.msk [vmem:[%s4 + $0x30] sm:$0xff] %vm2037, %v2027
  %2045 = vst.msk [vmem:[%s4 + $0x38] sm:$0xff] %vm2037, %v2028
  %2046 = vst.msk [vmem:[%s4 + $0x40] sm:$0xff] %vm2037, %v2029
  %2047 = vst.msk [vmem:[%s4 + $0x48] sm:$0xff] %vm2037, %v2030
  %2048 = vst.msk [vmem:[%s4 + $0x50] sm:$0xff] %vm2037, %v2031
  %2049 = vst.msk [vmem:[%s4 + $0x58] sm:$0xff] %vm2037, %v2032
  %2050 = vst.msk [vmem:[%s4 + $0x60] sm:$0xff] %vm2037, %v2033
  %2051 = vst.msk [vmem:[%s4 + $0x68] sm:$0xff] %vm2037, %v2034
  %2052 = vst.msk [vmem:[%s4 + $0x70] sm:$0xff] %vm2037, %v2035
  %2053 = vst.msk [vmem:[%s4 + $0x78] sm:$0xff] %vm2037, %v2036
  // Predicated region
  $region18: #{bn_relu_conv_bn_relu.1} parent=0 // pred_check
    _
  $region19: #{bn_relu_conv_bn_relu.1} parent=0 // pred_check_branch
    %2055 = sbr.rel (0) target = $region21
  $region20: #{bn_relu_conv_bn_relu.1} parent=0 // pred_region
    _
  $region21: #{bn_relu_conv_bn_relu.1} parent=0 // pred_fallthru
    _
  // Predicated region
  $region22: #{bn_relu_conv_bn_relu.1} parent=0 // pred_check
    _
  $region23: #{bn_relu_conv_bn_relu.1} parent=0 // pred_check_branch
    %2057 = sbr.rel (0) target = $region25
  $region24: #{bn_relu_conv_bn_relu.1} parent=0 // pred_region
    _
  $region25: #{bn_relu_conv_bn_relu.1} parent=0 // pred_fallthru
    _

</llo_original>
